<compile_context>
chip_gen: v6e
topology: v6e:2x2x1
jax: 0.10.0
libtpu: 0.0.40
codegen_flags: <defaults>
</compile_context>

<pallas_src>
import functools

import jax
import jax.numpy as jnp
from jax import lax
from jax.experimental import pallas as pl
from jax.experimental.pallas import tpu as pltpu


def _layer_norm(x, gamma, beta, eps=1e-5):
    mu = jnp.mean(x, axis=-1, keepdims=True)
    var = jnp.mean((x - mu) ** 2, axis=-1, keepdims=True)
    return (x - mu) * lax.rsqrt(var + eps) * gamma + beta


def _gelu(x):
    # tanh-form GELU (|err| vs exact erf form < ~1e-3); tanh runs on the EUP.
    c = 0.7978845608028654  # sqrt(2/pi)
    return 0.5 * x * (1.0 + jnp.tanh(c * (x + 0.044715 * x * x * x)))


def _additive_attn(x, lv, mask, band, cband, carry_ref, oh, oht, oh2, oht2,
                   head_size):
    """Fastformer additive attention (eqs 3-4 / 5-6) for one (TS, H) tile.

    x: (TS, H) f32; lv: (1, H) learned vector, already real-normed and scaled
    by rescale/head_size; mask: (TS, 1); band: (TS, TS) bf16 in-tile window
    matrix; cband: (TS, WC) bf16 cross-tile window matrix; carry_ref:
    (WC, H + n_heads) bf16 VMEM scratch holding the previous tile's last WC
    rows of [attn*xn | attn_per_head]; oh/(oht): (H, nh)/(nh, H) one-hot
    reduce/broadcast; oh2/oht2: block-diagonal doubled versions.
    """
    ts, hidden = x.shape
    nh = oh.shape[1]
    inv_hs = 1.0 / head_size

    # fused per-head mean / E[x^2] via one block-diagonal one-hot matmul
    xb = x.astype(jnp.bfloat16)
    x2b = (x * x).astype(jnp.bfloat16)
    stats = jnp.dot(jnp.concatenate([xb, x2b], axis=-1), oh2,
                    preferred_element_type=jnp.float32) * inv_hs      # (TS, 2nh)
    mean_h = stats[:, :nh]
    ex2_h = stats[:, nh:]
    var_h = (ex2_h - mean_h * mean_h) * (head_size / (head_size - 1.0))
    std_h = jnp.sqrt(jnp.maximum(var_h, 0.0))
    inv_std_h = pl.reciprocal(std_h + 1e-5, approx=True)              # (TS, nh) EUP

    # broadcast [mean | 1/std] back to feature width with one 0/1 matmul
    bc = jnp.dot(jnp.concatenate([mean_h, inv_std_h], axis=-1).astype(jnp.bfloat16),
                 oht2, preferred_element_type=jnp.float32)            # (TS, 2H)
    xn = (x - bc[:, :hidden]) * bc[:, hidden:]                        # real_norm(x)

    # additive-attention logits per head (rescale/head_size folded into lv)
    attn_h = jnp.dot((xn * lv).astype(jnp.bfloat16), oh,
                     preferred_element_type=jnp.float32)              # (TS, nh)
    attn_h = jnp.exp(attn_h + mask)
    attn_f = jnp.dot(attn_h.astype(jnp.bfloat16), oht,
                     preferred_element_type=jnp.float32)              # (TS, H)

    # windowed cumulative sums: numerator at feature width, denominator at
    # head width; in-tile band matmul + carry-band matmul vs previous tile.
    payload = jnp.concatenate([(attn_f * xn).astype(jnp.bfloat16),
                               attn_h.astype(jnp.bfloat16)], axis=-1)  # (TS, H+nh)
    sz = jnp.dot(band, payload, preferred_element_type=jnp.float32)
    sz = sz + jnp.dot(cband, carry_ref[...], preferred_element_type=jnp.float32)
    wc = carry_ref.shape[0]
    carry_ref[...] = payload[ts - wc:, :]          # becomes the next tile's carry

    s = sz[:, :hidden]
    rz_h = pl.reciprocal(sz[:, hidden:] + 1e-5, approx=True)          # (TS, nh) EUP
    rz_f = jnp.dot(rz_h.astype(jnp.bfloat16), oht,
                   preferred_element_type=jnp.float32)                # (TS, H)
    return s * rz_f


def _fastformer_kernel(mask_ref, x_ref, wqkv_ref, lvq_ref, lvk_ref,
                       ln1g_ref, ln1b_ref, ln2g_ref, ln2b_ref,
                       wboom_ref, wunboom_ref,
                       oh_ref, oht_ref, oh2_ref, oht2_ref,
                       out_ref,
                       cq_ref, ck_ref,
                       *, head_size, window_size):
    t = pl.program_id(1)

    @pl.when(t == 0)
    def _():                                  # new sequence: clear windowed-sum carries
        cq_ref[...] = jnp.zeros_like(cq_ref)
        ck_ref[...] = jnp.zeros_like(ck_ref)

    x = x_ref[0].astype(jnp.float32)          # (TS, H)
    mask = mask_ref[0]                        # (TS, 1)
    oh = oh_ref[...]
    oht = oht_ref[...]
    oh2 = oh2_ref[...]
    oht2 = oht2_ref[...]
    ts, hidden = x.shape
    wc = cq_ref.shape[0]

    # window band matrices generated in-register (0/1, bf16-exact)
    ii = lax.broadcasted_iota(jnp.int32, (ts, ts), 0)
    jj = lax.broadcasted_iota(jnp.int32, (ts, ts), 1)
    band = ((ii >= jj) & (ii - jj < window_size)).astype(jnp.bfloat16)
    ci = lax.broadcasted_iota(jnp.int32, (ts, wc), 0)
    cc = lax.broadcasted_iota(jnp.int32, (ts, wc), 1)
    cband = ((cc - ci) > (wc - window_size)).astype(jnp.bfloat16)

    # ---- FastSelfAttention ----
    xn = _layer_norm(x, ln1g_ref[...], ln1b_ref[...])
    qkv = jnp.dot(xn.astype(jnp.bfloat16), wqkv_ref[...],
                  preferred_element_type=jnp.float32)       # fused q|k|v projection
    q = qkv[:, :hidden]
    k = qkv[:, hidden:2 * hidden]
    v = qkv[:, 2 * hidden:]

    pooled_q = _additive_attn(q, lvq_ref[...], mask, band, cband, cq_ref,
                              oh, oht, oh2, oht2, head_size)
    mixed_k = pooled_q * k
    pooled_k = _additive_attn(mixed_k, lvk_ref[...], mask, band, cband, ck_ref,
                              oh, oht, oh2, oht2, head_size)
    mod = x + pooled_k * v                     # first residual

    # ---- Boom FFN: LayerNorm -> H->4H -> tanh GELU -> 4H->H, chunked over 4H ----
    bn = _layer_norm(mod, ln2g_ref[...], ln2b_ref[...]).astype(jnp.bfloat16)
    n_chunks = wboom_ref.shape[0]

    def boom_body(c, acc):
        h = jnp.dot(bn, wboom_ref[c], preferred_element_type=jnp.float32)
        h = _gelu(h)
        return acc + jnp.dot(h.astype(jnp.bfloat16), wunboom_ref[c],
                             preferred_element_type=jnp.float32)

    boom = lax.fori_loop(0, n_chunks, boom_body, jnp.zeros_like(mod),
                         unroll=True)
    out_ref[0] = (mod + boom).astype(out_ref.dtype)          # second residual


def _tpu_vmem_bytes():
    try:
        info = pltpu.get_tpu_info()
    except Exception:
        return None
    for name in ("vmem_capacity_bytes", "vmem_bytes", "vmem_size_bytes"):
        v = getattr(info, name, None)
        if v:
            return int(v)
    return None


def _pick_seq_tile(seq_len, window_size, big_vmem):
    if seq_len <= 256:
        return seq_len
    prefs = (256, 128, 512, 64, 1024, 32, 16, 8)
    if big_vmem and seq_len % 512 == 0 and window_size >= 128:
        # v5e/v6e (128 MiB VMEM): bigger tile halves grid-step overhead, and
        # the (TS, TS) band matmul is still mostly useful FLOPs here.
        prefs = (512, 256, 128, 64, 32, 16, 8)
    for ts in prefs:
        if seq_len % ts == 0 and ts >= window_size:
            return ts
    return seq_len


def _pick_boom_chunk(four_h, small_vmem):
    cap = 1024 if small_vmem else 2048        # smaller f32 intermediates on v7x
    if four_h <= cap:
        return four_h
    for c in (2048, 1024, 512, 256, 128):
        if c <= cap and four_h % c == 0:
            return c
    return four_h


def fastformer_layer(x, attention_mask, params, *, n_heads, window_size, rescale,
                     seq_tile=None):
    B, S, H = x.shape
    head_size = H // n_heads
    vmem_cap = _tpu_vmem_bytes()
    small_vmem = vmem_cap is not None and vmem_cap <= 96 * 1024 * 1024   # v7x-ish
    vmem_limit = int(vmem_cap * 0.8) if vmem_cap else None

    ts = seq_tile if seq_tile is not None else _pick_seq_tile(S, window_size,
                                                              not small_vmem)
    assert S % ts == 0, "sequence tile must divide the sequence length"
    n_tiles = S // ts
    if n_tiles > 1:
        assert window_size <= ts, "window_size must fit inside one sequence tile"
    # carry width padded to a bf16 sublane multiple so the carry store is unmasked
    wc = min(ts, -(-window_size // 16) * 16)

    four_h = 4 * H
    boom_chunk = _pick_boom_chunk(four_h, small_vmem)
    assert four_h % boom_chunk == 0
    n_chunks = four_h // boom_chunk

    # learned vectors: real_norm (unbiased std) + fold rescale / head_size in
    def real_norm_lv(lv):
        mu = lv.mean(-1, keepdims=True)
        sd = jnp.sqrt(((lv - mu) ** 2).sum(-1, keepdims=True) / (head_size - 1.0))
        return (lv - mu) / (sd + 1e-5)

    lv_scale = float(rescale) / head_size
    lvq = (real_norm_lv(params["query_attn"]) * lv_scale).reshape(1, H).astype(jnp.float32)
    lvk = (real_norm_lv(params["key_attn"]) * lv_scale).reshape(1, H).astype(jnp.float32)

    # per-head one-hot reduce / broadcast matrices (0/1, bf16-exact)
    oh = (jnp.arange(H)[:, None] // head_size
          == jnp.arange(n_heads)[None, :]).astype(jnp.bfloat16)        # (H, nh)
    oht = oh.T                                                         # (nh, H)
    zoh = jnp.zeros_like(oh)
    oh2 = jnp.concatenate([jnp.concatenate([oh, zoh], axis=1),
                           jnp.concatenate([zoh, oh], axis=1)], axis=0)  # (2H, 2nh)
    oht2 = oh2.T                                                         # (2nh, 2H)

    w_proj_t = params["w_proj"].T.astype(jnp.bfloat16)        # (H, 3H); order q,k,v
    # boom / unboom pre-chunked along the 4H axis: (n_chunks, H, bc) / (n_chunks, bc, H)
    wboom_c = (params["w_boom"].reshape(n_chunks, boom_chunk, H)
               .transpose(0, 2, 1).astype(jnp.bfloat16))
    wunboom_c = params["w_unboom"].T.reshape(n_chunks, boom_chunk, H).astype(jnp.bfloat16)

    ln1g = params["ln1_g"].reshape(1, H).astype(jnp.float32)
    ln1b = params["ln1_b"].reshape(1, H).astype(jnp.float32)
    ln2g = params["ln2_g"].reshape(1, H).astype(jnp.float32)
    ln2b = params["ln2_b"].reshape(1, H).astype(jnp.float32)

    def const2(shape):
        return pl.BlockSpec(shape, lambda b, t: (0, 0))

    def const3(shape):
        return pl.BlockSpec(shape, lambda b, t: (0, 0, 0))

    kernel = functools.partial(_fastformer_kernel, head_size=head_size,
                               window_size=window_size)
    return pl.pallas_call(
        kernel,
        out_shape=jax.ShapeDtypeStruct((B, S, H), x.dtype),
        grid_spec=pltpu.PrefetchScalarGridSpec(
            num_scalar_prefetch=0,
            grid=(B, n_tiles),
            in_specs=[
                pl.BlockSpec((1, ts, 1), lambda b, t: (b, t, 0)),   # attention mask
                pl.BlockSpec((1, ts, H), lambda b, t: (b, t, 0)),   # activations
                const2((H, 3 * H)),                                 # fused Wqkv
                const2((1, H)), const2((1, H)),                     # normed+scaled q/k vectors
                const2((1, H)), const2((1, H)),                     # attn LayerNorm g/b
                const2((1, H)), const2((1, H)),                     # boom LayerNorm g/b
                const3((n_chunks, H, boom_chunk)),                  # boom weight chunks
                const3((n_chunks, boom_chunk, H)),                  # unboom weight chunks
                const2((H, n_heads)), const2((n_heads, H)),         # head one-hots
                const2((2 * H, 2 * n_heads)),                       # block-diag reduce
                const2((2 * n_heads, 2 * H)),                       # block-diag broadcast
            ],
            out_specs=pl.BlockSpec((1, ts, H), lambda b, t: (b, t, 0)),
            scratch_shapes=[pltpu.VMEM((wc, H + n_heads), jnp.bfloat16),   # q-path carry
                            pltpu.VMEM((wc, H + n_heads), jnp.bfloat16)],  # k-path carry
        ),
        compiler_params=pltpu.CompilerParams(
            dimension_semantics=("parallel", "arbitrary"),
            vmem_limit_bytes=vmem_limit),
    )(attention_mask, x, w_proj_t, lvq, lvk, ln1g, ln1b, ln2g, ln2b,
      wboom_c, wunboom_c, oh, oht, oh2, oht2)


# ---------------- pure-JAX reference (mirrors the PyTorch code) ----------------
def fastformer_layer_ref(x, mask, p, *, n_heads, window_size, rescale):
    B, S, H = x.shape
    hs = H // n_heads

    def ln(v, g, b):
        mu = v.mean(-1, keepdims=True)
        var = ((v - mu) ** 2).mean(-1, keepdims=True)
        return (v - mu) / jnp.sqrt(var + 1e-5) * g + b

    def real_norm(v):
        mu = v.mean(-1, keepdims=True)
        sd = jnp.sqrt(((v - mu) ** 2).sum(-1, keepdims=True) / (v.shape[-1] - 1.0))
        return (v - mu) / (sd + 1e-5)

    def window_align(c):
        cl = c.at[:, -window_size:].set(0.0)
        return jnp.roll(cl, window_size, axis=1)

    def additive(v, lv):
        vr = v.reshape(B, S, n_heads, hs)
        vn = real_norm(vr)
        lvn = real_norm(lv)
        attn = (vn * lvn).sum(-1) / hs * rescale + mask
        attn = jnp.exp(attn)[..., None]
        s = jnp.cumsum(attn * vn, axis=1)
        s = s - window_align(s)
        z = jnp.cumsum(attn, axis=1)
        z = z - window_align(z)
        return (s / (z + 1e-5)).reshape(B, S, H)

    xn = ln(x, p["ln1_g"], p["ln1_b"])
    proj = xn @ p["w_proj"].T
    q, k, v = jnp.split(proj, 3, axis=-1)
    pq = additive(q, p["query_attn"])
    pk = additive(pq * k, p["key_attn"])
    mod = x + pk * v
    bn = ln(mod, p["ln2_g"], p["ln2_b"])
    h = bn @ p["w_boom"].T
    h = 0.5 * h * (1.0 + lax.erf(h / jnp.sqrt(2.0)))
    return mod + h @ p["w_unboom"].T


def _run_case(name, *, B, S, H, n_heads, window_size, rescale, seq_tile, seed):
    head_size = H // n_heads
    ir = 0.02
    key = jax.random.PRNGKey(seed)
    kp, kx, km, kg1, kb1, kg2, kb2 = jax.random.split(key, 7)
    kw = jax.random.split(kp, 5)
    params = {
        "w_proj": jax.random.normal(kw[0], (3 * H, H), jnp.float32) * ir,
        "query_attn": jax.random.normal(kw[1], (n_heads, head_size), jnp.float32) * ir,
        "key_attn": jax.random.normal(kw[2], (n_heads, head_size), jnp.float32) * ir,
        "w_boom": jax.random.normal(kw[3], (4 * H, H), jnp.float32) * ir,
        "w_unboom": jax.random.normal(kw[4], (H, 4 * H), jnp.float32) * ir,
        "ln1_g": 1.0 + 0.1 * jax.random.normal(kg1, (H,), jnp.float32),
        "ln1_b": 0.1 * jax.random.normal(kb1, (H,), jnp.float32),
        "ln2_g": 1.0 + 0.1 * jax.random.normal(kg2, (H,), jnp.float32),
        "ln2_b": 0.1 * jax.random.normal(kb2, (H,), jnp.float32),
    }
    x = jax.random.normal(kx, (B, S, H), jnp.float32)
    attention_mask = -2.0 * jax.random.uniform(km, (B, S, 1), jnp.float32)

    out = jax.block_until_ready(
        fastformer_layer(x, attention_mask, params, n_heads=n_heads,
                         window_size=window_size, rescale=rescale,
                         seq_tile=seq_tile))
    ref = jax.block_until_ready(
        fastformer_layer_ref(x, attention_mask, params, n_heads=n_heads,
                             window_size=window_size, rescale=rescale))

    assert out.shape == (B, S, H)
    assert bool(jnp.isfinite(out).all()), f"{name}: non-finite output"
    max_err = float(jnp.max(jnp.abs(out - ref)))
    assert max_err < 5e-2, f"{name}: max abs error too large: {max_err}"
    return max_err


if __name__ == "__main__":
    # single sequence tile (TS == S)
    _run_case("single_tile", B=2, S=8, H=32, n_heads=4, window_size=4,
              rescale=4.0, seq_tile=None, seed=0)
    # multiple sequence tiles: exercises the cross-tile windowed-sum carries
    _run_case("multi_tile", B=2, S=64, H=32, n_heads=4, window_size=4,
              rescale=4.0, seq_tile=16, seed=0)
    print("KERNEL_OK")
</pallas_src>

<mosaic_0001>
module attributes {stable_mosaic.version = 11 : i64} {
  func.func @_fastformer_kernel(%arg0: i32, %arg1: i32, %arg2: memref<1x8x1xf32, #tpu.memory_space<vmem>>, %arg3: memref<1x8x32xf32, #tpu.memory_space<vmem>>, %arg4: memref<32x96xbf16, #tpu.memory_space<vmem>>, %arg5: memref<1x32xf32, #tpu.memory_space<vmem>>, %arg6: memref<1x32xf32, #tpu.memory_space<vmem>>, %arg7: memref<1x32xf32, #tpu.memory_space<vmem>>, %arg8: memref<1x32xf32, #tpu.memory_space<vmem>>, %arg9: memref<1x32xf32, #tpu.memory_space<vmem>>, %arg10: memref<1x32xf32, #tpu.memory_space<vmem>>, %arg11: memref<1x32x128xbf16, #tpu.memory_space<vmem>>, %arg12: memref<1x128x32xbf16, #tpu.memory_space<vmem>>, %arg13: memref<32x4xbf16, #tpu.memory_space<vmem>>, %arg14: memref<4x32xbf16, #tpu.memory_space<vmem>>, %arg15: memref<64x8xbf16, #tpu.memory_space<vmem>>, %arg16: memref<8x64xbf16, #tpu.memory_space<vmem>>, %arg17: memref<1x8x32xf32, #tpu.memory_space<vmem>>, %arg18: memref<8x36xbf16, #tpu.memory_space<vmem>>, %arg19: memref<8x36xbf16, #tpu.memory_space<vmem>>) attributes {dimension_semantics = [#tpu.dimension_semantics<parallel>, #tpu.dimension_semantics<arbitrary>], iteration_bounds = array<i64: 2, 1>, scalar_prefetch = 0 : i64, scratch_operands = 2 : i64, tpu.core_type = #tpu.core_type<tc>, window_params = [{transform_indices = @transform_0, window_bounds = array<i64: 1, 8, 1>}, {transform_indices = @transform_1, window_bounds = array<i64: 1, 8, 32>}, {pipeline_mode = #tpu.pipeline_mode<synchronous>, transform_indices = @transform_2, window_bounds = array<i64: 32, 96>}, {pipeline_mode = #tpu.pipeline_mode<synchronous>, transform_indices = @transform_3, window_bounds = array<i64: 1, 32>}, {pipeline_mode = #tpu.pipeline_mode<synchronous>, transform_indices = @transform_4, window_bounds = array<i64: 1, 32>}, {pipeline_mode = #tpu.pipeline_mode<synchronous>, transform_indices = @transform_5, window_bounds = array<i64: 1, 32>}, {pipeline_mode = #tpu.pipeline_mode<synchronous>, transform_indices = @transform_6, window_bounds = array<i64: 1, 32>}, {pipeline_mode = #tpu.pipeline_mode<synchronous>, transform_indices = @transform_7, window_bounds = array<i64: 1, 32>}, {pipeline_mode = #tpu.pipeline_mode<synchronous>, transform_indices = @transform_8, window_bounds = array<i64: 1, 32>}, {pipeline_mode = #tpu.pipeline_mode<synchronous>, transform_indices = @transform_9, window_bounds = array<i64: 1, 32, 128>}, {pipeline_mode = #tpu.pipeline_mode<synchronous>, transform_indices = @transform_10, window_bounds = array<i64: 1, 128, 32>}, {pipeline_mode = #tpu.pipeline_mode<synchronous>, transform_indices = @transform_11, window_bounds = array<i64: 32, 4>}, {pipeline_mode = #tpu.pipeline_mode<synchronous>, transform_indices = @transform_12, window_bounds = array<i64: 4, 32>}, {pipeline_mode = #tpu.pipeline_mode<synchronous>, transform_indices = @transform_13, window_bounds = array<i64: 64, 8>}, {pipeline_mode = #tpu.pipeline_mode<synchronous>, transform_indices = @transform_14, window_bounds = array<i64: 8, 64>}, {transform_indices = @transform_15, window_bounds = array<i64: 1, 8, 32>}]} {
    %c0_i32 = arith.constant 0 : i32
    %0 = arith.cmpi eq, %arg1, %c0_i32 : i32
    %1 = arith.extui %0 : i1 to i32
    %c0_i32_0 = arith.constant 0 : i32
    %2 = arith.cmpi ne, %1, %c0_i32_0 : i32
    scf.if %2 {
      %cst_86 = arith.constant 0.000000e+00 : bf16
      %221 = vector.broadcast %cst_86 : bf16 to vector<8x36xbf16>
      %c0_87 = arith.constant 0 : index
      %c0_88 = arith.constant 0 : index
      %222 = vector.load %arg18[%c0_87, %c0_88] : memref<8x36xbf16, #tpu.memory_space<vmem>>, vector<8x36xbf16>
      tpu.vector_store %arg18[%c0_87, %c0_88], %221 {strides = array<i32>} : memref<8x36xbf16, #tpu.memory_space<vmem>>, vector<8x36xbf16>,
      %cst_89 = arith.constant 0.000000e+00 : bf16
      %223 = vector.broadcast %cst_89 : bf16 to vector<8x36xbf16>
      %c0_90 = arith.constant 0 : index
      %c0_91 = arith.constant 0 : index
      %224 = vector.load %arg19[%c0_90, %c0_91] : memref<8x36xbf16, #tpu.memory_space<vmem>>, vector<8x36xbf16>
      tpu.vector_store %arg19[%c0_90, %c0_91], %223 {strides = array<i32>} : memref<8x36xbf16, #tpu.memory_space<vmem>>, vector<8x36xbf16>,
    } else {
    }
    %c0 = arith.constant 0 : index
    %c0_1 = arith.constant 0 : index
    %c0_2 = arith.constant 0 : index
    %3 = vector.load %arg3[%c0, %c0_1, %c0_2] : memref<1x8x32xf32, #tpu.memory_space<vmem>>, vector<1x8x32xf32>
    %4 = vector.shape_cast %3 : vector<1x8x32xf32> to vector<8x32xf32>
    %c0_3 = arith.constant 0 : index
    %c0_4 = arith.constant 0 : index
    %c0_5 = arith.constant 0 : index
    %5 = vector.load %arg2[%c0_3, %c0_4, %c0_5] : memref<1x8x1xf32, #tpu.memory_space<vmem>>, vector<1x8x1xf32>
    %6 = vector.shape_cast %5 : vector<1x8x1xf32> to vector<8x1xf32>
    %c0_6 = arith.constant 0 : index
    %c0_7 = arith.constant 0 : index
    %7 = vector.load %arg13[%c0_6, %c0_7] : memref<32x4xbf16, #tpu.memory_space<vmem>>, vector<32x4xbf16>
    %c0_8 = arith.constant 0 : index
    %c0_9 = arith.constant 0 : index
    %8 = vector.load %arg14[%c0_8, %c0_9] : memref<4x32xbf16, #tpu.memory_space<vmem>>, vector<4x32xbf16>
    %c0_10 = arith.constant 0 : index
    %c0_11 = arith.constant 0 : index
    %9 = vector.load %arg15[%c0_10, %c0_11] : memref<64x8xbf16, #tpu.memory_space<vmem>>, vector<64x8xbf16>
    %c0_12 = arith.constant 0 : index
    %c0_13 = arith.constant 0 : index
    %10 = vector.load %arg16[%c0_12, %c0_13] : memref<8x64xbf16, #tpu.memory_space<vmem>>, vector<8x64xbf16>
    %11 = tpu.iota {dimensions = array<i32: 0>} : vector<8x8xi32>
    %12 = tpu.iota {dimensions = array<i32: 1>} : vector<8x8xi32>
    %13 = arith.cmpi sge, %11, %12 : vector<8x8xi32>
    %14 = arith.subi %11, %12 : vector<8x8xi32>
    %c4_i32 = arith.constant 4 : i32
    %15 = vector.broadcast %c4_i32 : i32 to vector<8x8xi32>
    %16 = arith.cmpi slt, %14, %15 : vector<8x8xi32>
    %17 = arith.andi %13, %16 : vector<8x8xi1>
    %18 = arith.extui %17 : vector<8x8xi1> to vector<8x8xi32>
    %19 = arith.sitofp %18 : vector<8x8xi32> to vector<8x8xf32>
    %20 = arith.truncf %19 : vector<8x8xf32> to vector<8x8xbf16>
    %21 = tpu.iota {dimensions = array<i32: 0>} : vector<8x8xi32>
    %22 = tpu.iota {dimensions = array<i32: 1>} : vector<8x8xi32>
    %23 = arith.subi %22, %21 : vector<8x8xi32>
    %c4_i32_14 = arith.constant 4 : i32
    %24 = vector.broadcast %c4_i32_14 : i32 to vector<8x8xi32>
    %25 = arith.cmpi sgt, %23, %24 : vector<8x8xi32>
    %26 = arith.extui %25 : vector<8x8xi1> to vector<8x8xi32>
    %27 = arith.sitofp %26 : vector<8x8xi32> to vector<8x8xf32>
    %28 = arith.truncf %27 : vector<8x8xf32> to vector<8x8xbf16>
    %c0_15 = arith.constant 0 : index
    %c0_16 = arith.constant 0 : index
    %29 = vector.load %arg7[%c0_15, %c0_16] : memref<1x32xf32, #tpu.memory_space<vmem>>, vector<1x32xf32>
    %c0_17 = arith.constant 0 : index
    %c0_18 = arith.constant 0 : index
    %30 = vector.load %arg8[%c0_17, %c0_18] : memref<1x32xf32, #tpu.memory_space<vmem>>, vector<1x32xf32>
    %cst = arith.constant dense<0.000000e+00> : vector<8xf32>
    %31 = vector.multi_reduction <add>, %4, %cst [1] : vector<8x32xf32> to vector<8xf32>
    %32 = vector.shape_cast %31 : vector<8xf32> to vector<8x1xf32>
    %cst_19 = arith.constant 3.200000e+01 : f32
    %33 = vector.broadcast %cst_19 : f32 to vector<8x1xf32>
    %34 = arith.divf %32, %33 : vector<8x1xf32>
    %35 = vector.broadcast %34 : vector<8x1xf32> to vector<8x32xf32>
    %36 = arith.subf %4, %35 : vector<8x32xf32>
    %37 = arith.mulf %36, %36 : vector<8x32xf32>
    %cst_20 = arith.constant dense<0.000000e+00> : vector<8xf32>
    %38 = vector.multi_reduction <add>, %37, %cst_20 [1] : vector<8x32xf32> to vector<8xf32>
    %39 = vector.shape_cast %38 : vector<8xf32> to vector<8x1xf32>
    %cst_21 = arith.constant 3.200000e+01 : f32
    %40 = vector.broadcast %cst_21 : f32 to vector<8x1xf32>
    %41 = arith.divf %39, %40 : vector<8x1xf32>
    %42 = vector.broadcast %34 : vector<8x1xf32> to vector<8x32xf32>
    %43 = arith.subf %4, %42 : vector<8x32xf32>
    %cst_22 = arith.constant 9.99999974E-6 : f32
    %44 = vector.broadcast %cst_22 : f32 to vector<8x1xf32>
    %45 = arith.addf %41, %44 : vector<8x1xf32>
    %46 = math.rsqrt %45 : vector<8x1xf32>
    %47 = vector.broadcast %46 : vector<8x1xf32> to vector<8x32xf32>
    %48 = arith.mulf %43, %47 : vector<8x32xf32>
    %49 = vector.broadcast %29 : vector<1x32xf32> to vector<8x32xf32>
    %50 = arith.mulf %48, %49 : vector<8x32xf32>
    %51 = vector.broadcast %30 : vector<1x32xf32> to vector<8x32xf32>
    %52 = arith.addf %50, %51 : vector<8x32xf32>
    %53 = arith.truncf %52 : vector<8x32xf32> to vector<8x32xbf16>
    %c0_23 = arith.constant 0 : index
    %c0_24 = arith.constant 0 : index
    %54 = vector.load %arg4[%c0_23, %c0_24] : memref<32x96xbf16, #tpu.memory_space<vmem>>, vector<32x96xbf16>
    %cst_25 = arith.constant dense<0.000000e+00> : vector<8x96xf32>
    %55 = tpu.matmul %53, %54, %cst_25 {dimension_numbers = #tpu.dot_dimension_numbers<[1], [0], [0], [1], [0, 0, 1, 1], [], []>} : vector<8x32xbf16>, vector<32x96xbf16>, vector<8x96xf32> -> vector<8x96xf32>
    %56 = vector.extract_strided_slice %55 {offsets = [0, 0], sizes = [8, 32], strides = [1, 1]} : vector<8x96xf32> to vector<8x32xf32>
    %57 = vector.extract_strided_slice %55 {offsets = [0, 32], sizes = [8, 32], strides = [1, 1]} : vector<8x96xf32> to vector<8x32xf32>
    %58 = vector.extract_strided_slice %55 {offsets = [0, 64], sizes = [8, 32], strides = [1, 1]} : vector<8x96xf32> to vector<8x32xf32>
    %c0_26 = arith.constant 0 : index
    %c0_27 = arith.constant 0 : index
    %59 = vector.load %arg5[%c0_26, %c0_27] : memref<1x32xf32, #tpu.memory_space<vmem>>, vector<1x32xf32>
    %60 = arith.truncf %56 : vector<8x32xf32> to vector<8x32xbf16>
    %61 = arith.mulf %56, %56 : vector<8x32xf32>
    %62 = arith.truncf %61 : vector<8x32xf32> to vector<8x32xbf16>
    %63 = tpu.concatenate %60, %62 in 1 : vector<8x32xbf16>, vector<8x32xbf16> -> vector<8x64xbf16>
    %cst_28 = arith.constant dense<0.000000e+00> : vector<8x8xf32>
    %64 = tpu.matmul %63, %9, %cst_28 {dimension_numbers = #tpu.dot_dimension_numbers<[1], [0], [0], [1], [0, 0, 1, 1], [], []>} : vector<8x64xbf16>, vector<64x8xbf16>, vector<8x8xf32> -> vector<8x8xf32>
    %cst_29 = arith.constant 1.250000e-01 : f32
    %65 = vector.broadcast %cst_29 : f32 to vector<8x8xf32>
    %66 = arith.mulf %64, %65 : vector<8x8xf32>
    %67 = vector.extract_strided_slice %66 {offsets = [0, 0], sizes = [8, 4], strides = [1, 1]} : vector<8x8xf32> to vector<8x4xf32>
    %68 = vector.extract_strided_slice %66 {offsets = [0, 4], sizes = [8, 4], strides = [1, 1]} : vector<8x8xf32> to vector<8x4xf32>
    %69 = arith.mulf %67, %67 : vector<8x4xf32>
    %70 = arith.subf %68, %69 : vector<8x4xf32>
    %cst_30 = arith.constant 1.14285719 : f32
    %71 = vector.broadcast %cst_30 : f32 to vector<8x4xf32>
    %72 = arith.mulf %70, %71 : vector<8x4xf32>
    %cst_31 = arith.constant 0.000000e+00 : f32
    %73 = vector.broadcast %cst_31 : f32 to vector<8x4xf32>
    %74 = arith.maximumf %72, %73 : vector<8x4xf32>
    %75 = math.sqrt %74 : vector<8x4xf32>
    %cst_32 = arith.constant 9.99999974E-6 : f32
    %76 = vector.broadcast %cst_32 : f32 to vector<8x4xf32>
    %77 = arith.addf %75, %76 : vector<8x4xf32>
    %78 = tpu.reciprocal %77 {approx = true} : vector<8x4xf32> -> vector<8x4xf32>
    %79 = tpu.concatenate %67, %78 in 1 : vector<8x4xf32>, vector<8x4xf32> -> vector<8x8xf32>
    %80 = arith.truncf %79 : vector<8x8xf32> to vector<8x8xbf16>
    %cst_33 = arith.constant dense<0.000000e+00> : vector<8x64xf32>
    %81 = tpu.matmul %80, %10, %cst_33 {dimension_numbers = #tpu.dot_dimension_numbers<[1], [0], [0], [1], [0, 0, 1, 1], [], []>} : vector<8x8xbf16>, vector<8x64xbf16>, vector<8x64xf32> -> vector<8x64xf32>
    %82 = vector.extract_strided_slice %81 {offsets = [0, 0], sizes = [8, 32], strides = [1, 1]} : vector<8x64xf32> to vector<8x32xf32>
    %83 = arith.subf %56, %82 : vector<8x32xf32>
    %84 = vector.extract_strided_slice %81 {offsets = [0, 32], sizes = [8, 32], strides = [1, 1]} : vector<8x64xf32> to vector<8x32xf32>
    %85 = arith.mulf %83, %84 : vector<8x32xf32>
    %86 = vector.broadcast %59 : vector<1x32xf32> to vector<8x32xf32>
    %87 = arith.mulf %85, %86 : vector<8x32xf32>
    %88 = arith.truncf %87 : vector<8x32xf32> to vector<8x32xbf16>
    %cst_34 = arith.constant dense<0.000000e+00> : vector<8x4xf32>
    %89 = tpu.matmul %88, %7, %cst_34 {dimension_numbers = #tpu.dot_dimension_numbers<[1], [0], [0], [1], [0, 0, 1, 1], [], []>} : vector<8x32xbf16>, vector<32x4xbf16>, vector<8x4xf32> -> vector<8x4xf32>
    %90 = vector.broadcast %6 : vector<8x1xf32> to vector<8x4xf32>
    %91 = arith.addf %89, %90 : vector<8x4xf32>
    %92 = math.exp %91 : vector<8x4xf32>
    %93 = arith.truncf %92 : vector<8x4xf32> to vector<8x4xbf16>
    %cst_35 = arith.constant dense<0.000000e+00> : vector<8x32xf32>
    %94 = tpu.matmul %93, %8, %cst_35 {dimension_numbers = #tpu.dot_dimension_numbers<[1], [0], [0], [1], [0, 0, 1, 1], [], []>} : vector<8x4xbf16>, vector<4x32xbf16>, vector<8x32xf32> -> vector<8x32xf32>
    %95 = arith.mulf %94, %85 : vector<8x32xf32>
    %96 = arith.truncf %95 : vector<8x32xf32> to vector<8x32xbf16>
    %97 = arith.truncf %92 : vector<8x4xf32> to vector<8x4xbf16>
    %98 = tpu.concatenate %96, %97 in 1 : vector<8x32xbf16>, vector<8x4xbf16> -> vector<8x36xbf16>
    %cst_36 = arith.constant dense<0.000000e+00> : vector<8x36xf32>
    %99 = tpu.matmul %20, %98, %cst_36 {dimension_numbers = #tpu.dot_dimension_numbers<[1], [0], [0], [1], [0, 0, 1, 1], [], []>} : vector<8x8xbf16>, vector<8x36xbf16>, vector<8x36xf32> -> vector<8x36xf32>
    %c0_37 = arith.constant 0 : index
    %c0_38 = arith.constant 0 : index
    %100 = vector.load %arg18[%c0_37, %c0_38] : memref<8x36xbf16, #tpu.memory_space<vmem>>, vector<8x36xbf16>
    %cst_39 = arith.constant dense<0.000000e+00> : vector<8x36xf32>
    %101 = tpu.matmul %28, %100, %cst_39 {dimension_numbers = #tpu.dot_dimension_numbers<[1], [0], [0], [1], [0, 0, 1, 1], [], []>} : vector<8x8xbf16>, vector<8x36xbf16>, vector<8x36xf32> -> vector<8x36xf32>
    %102 = arith.addf %99, %101 : vector<8x36xf32>
    %c0_40 = arith.constant 0 : index
    %c0_41 = arith.constant 0 : index
    %103 = vector.load %arg18[%c0_40, %c0_41] : memref<8x36xbf16, #tpu.memory_space<vmem>>, vector<8x36xbf16>
    tpu.vector_store %arg18[%c0_40, %c0_41], %98 {strides = array<i32>} : memref<8x36xbf16, #tpu.memory_space<vmem>>, vector<8x36xbf16>,
    %104 = vector.extract_strided_slice %102 {offsets = [0, 0], sizes = [8, 32], strides = [1, 1]} : vector<8x36xf32> to vector<8x32xf32>
    %105 = vector.extract_strided_slice %102 {offsets = [0, 32], sizes = [8, 4], strides = [1, 1]} : vector<8x36xf32> to vector<8x4xf32>
    %cst_42 = arith.constant 9.99999974E-6 : f32
    %106 = vector.broadcast %cst_42 : f32 to vector<8x4xf32>
    %107 = arith.addf %105, %106 : vector<8x4xf32>
    %108 = tpu.reciprocal %107 {approx = true} : vector<8x4xf32> -> vector<8x4xf32>
    %109 = arith.truncf %108 : vector<8x4xf32> to vector<8x4xbf16>
    %cst_43 = arith.constant dense<0.000000e+00> : vector<8x32xf32>
    %110 = tpu.matmul %109, %8, %cst_43 {dimension_numbers = #tpu.dot_dimension_numbers<[1], [0], [0], [1], [0, 0, 1, 1], [], []>} : vector<8x4xbf16>, vector<4x32xbf16>, vector<8x32xf32> -> vector<8x32xf32>
    %111 = arith.mulf %104, %110 : vector<8x32xf32>
    %112 = arith.mulf %111, %57 : vector<8x32xf32>
    %c0_44 = arith.constant 0 : index
    %c0_45 = arith.constant 0 : index
    %113 = vector.load %arg6[%c0_44, %c0_45] : memref<1x32xf32, #tpu.memory_space<vmem>>, vector<1x32xf32>
    %114 = arith.truncf %112 : vector<8x32xf32> to vector<8x32xbf16>
    %115 = arith.mulf %112, %112 : vector<8x32xf32>
    %116 = arith.truncf %115 : vector<8x32xf32> to vector<8x32xbf16>
    %117 = tpu.concatenate %114, %116 in 1 : vector<8x32xbf16>, vector<8x32xbf16> -> vector<8x64xbf16>
    %cst_46 = arith.constant dense<0.000000e+00> : vector<8x8xf32>
    %118 = tpu.matmul %117, %9, %cst_46 {dimension_numbers = #tpu.dot_dimension_numbers<[1], [0], [0], [1], [0, 0, 1, 1], [], []>} : vector<8x64xbf16>, vector<64x8xbf16>, vector<8x8xf32> -> vector<8x8xf32>
    %cst_47 = arith.constant 1.250000e-01 : f32
    %119 = vector.broadcast %cst_47 : f32 to vector<8x8xf32>
    %120 = arith.mulf %118, %119 : vector<8x8xf32>
    %121 = vector.extract_strided_slice %120 {offsets = [0, 0], sizes = [8, 4], strides = [1, 1]} : vector<8x8xf32> to vector<8x4xf32>
    %122 = vector.extract_strided_slice %120 {offsets = [0, 4], sizes = [8, 4], strides = [1, 1]} : vector<8x8xf32> to vector<8x4xf32>
    %123 = arith.mulf %121, %121 : vector<8x4xf32>
    %124 = arith.subf %122, %123 : vector<8x4xf32>
    %cst_48 = arith.constant 1.14285719 : f32
    %125 = vector.broadcast %cst_48 : f32 to vector<8x4xf32>
    %126 = arith.mulf %124, %125 : vector<8x4xf32>
    %cst_49 = arith.constant 0.000000e+00 : f32
    %127 = vector.broadcast %cst_49 : f32 to vector<8x4xf32>
    %128 = arith.maximumf %126, %127 : vector<8x4xf32>
    %129 = math.sqrt %128 : vector<8x4xf32>
    %cst_50 = arith.constant 9.99999974E-6 : f32
    %130 = vector.broadcast %cst_50 : f32 to vector<8x4xf32>
    %131 = arith.addf %129, %130 : vector<8x4xf32>
    %132 = tpu.reciprocal %131 {approx = true} : vector<8x4xf32> -> vector<8x4xf32>
    %133 = tpu.concatenate %121, %132 in 1 : vector<8x4xf32>, vector<8x4xf32> -> vector<8x8xf32>
    %134 = arith.truncf %133 : vector<8x8xf32> to vector<8x8xbf16>
    %cst_51 = arith.constant dense<0.000000e+00> : vector<8x64xf32>
    %135 = tpu.matmul %134, %10, %cst_51 {dimension_numbers = #tpu.dot_dimension_numbers<[1], [0], [0], [1], [0, 0, 1, 1], [], []>} : vector<8x8xbf16>, vector<8x64xbf16>, vector<8x64xf32> -> vector<8x64xf32>
    %136 = vector.extract_strided_slice %135 {offsets = [0, 0], sizes = [8, 32], strides = [1, 1]} : vector<8x64xf32> to vector<8x32xf32>
    %137 = arith.subf %112, %136 : vector<8x32xf32>
    %138 = vector.extract_strided_slice %135 {offsets = [0, 32], sizes = [8, 32], strides = [1, 1]} : vector<8x64xf32> to vector<8x32xf32>
    %139 = arith.mulf %137, %138 : vector<8x32xf32>
    %140 = vector.broadcast %113 : vector<1x32xf32> to vector<8x32xf32>
    %141 = arith.mulf %139, %140 : vector<8x32xf32>
    %142 = arith.truncf %141 : vector<8x32xf32> to vector<8x32xbf16>
    %cst_52 = arith.constant dense<0.000000e+00> : vector<8x4xf32>
    %143 = tpu.matmul %142, %7, %cst_52 {dimension_numbers = #tpu.dot_dimension_numbers<[1], [0], [0], [1], [0, 0, 1, 1], [], []>} : vector<8x32xbf16>, vector<32x4xbf16>, vector<8x4xf32> -> vector<8x4xf32>
    %144 = vector.broadcast %6 : vector<8x1xf32> to vector<8x4xf32>
    %145 = arith.addf %143, %144 : vector<8x4xf32>
    %146 = math.exp %145 : vector<8x4xf32>
    %147 = arith.truncf %146 : vector<8x4xf32> to vector<8x4xbf16>
    %cst_53 = arith.constant dense<0.000000e+00> : vector<8x32xf32>
    %148 = tpu.matmul %147, %8, %cst_53 {dimension_numbers = #tpu.dot_dimension_numbers<[1], [0], [0], [1], [0, 0, 1, 1], [], []>} : vector<8x4xbf16>, vector<4x32xbf16>, vector<8x32xf32> -> vector<8x32xf32>
    %149 = arith.mulf %148, %139 : vector<8x32xf32>
    %150 = arith.truncf %149 : vector<8x32xf32> to vector<8x32xbf16>
    %151 = arith.truncf %146 : vector<8x4xf32> to vector<8x4xbf16>
    %152 = tpu.concatenate %150, %151 in 1 : vector<8x32xbf16>, vector<8x4xbf16> -> vector<8x36xbf16>
    %cst_54 = arith.constant dense<0.000000e+00> : vector<8x36xf32>
    %153 = tpu.matmul %20, %152, %cst_54 {dimension_numbers = #tpu.dot_dimension_numbers<[1], [0], [0], [1], [0, 0, 1, 1], [], []>} : vector<8x8xbf16>, vector<8x36xbf16>, vector<8x36xf32> -> vector<8x36xf32>
    %c0_55 = arith.constant 0 : index
    %c0_56 = arith.constant 0 : index
    %154 = vector.load %arg19[%c0_55, %c0_56] : memref<8x36xbf16, #tpu.memory_space<vmem>>, vector<8x36xbf16>
    %cst_57 = arith.constant dense<0.000000e+00> : vector<8x36xf32>
    %155 = tpu.matmul %28, %154, %cst_57 {dimension_numbers = #tpu.dot_dimension_numbers<[1], [0], [0], [1], [0, 0, 1, 1], [], []>} : vector<8x8xbf16>, vector<8x36xbf16>, vector<8x36xf32> -> vector<8x36xf32>
    %156 = arith.addf %153, %155 : vector<8x36xf32>
    %c0_58 = arith.constant 0 : index
    %c0_59 = arith.constant 0 : index
    %157 = vector.load %arg19[%c0_58, %c0_59] : memref<8x36xbf16, #tpu.memory_space<vmem>>, vector<8x36xbf16>
    tpu.vector_store %arg19[%c0_58, %c0_59], %152 {strides = array<i32>} : memref<8x36xbf16, #tpu.memory_space<vmem>>, vector<8x36xbf16>,
    %158 = vector.extract_strided_slice %156 {offsets = [0, 0], sizes = [8, 32], strides = [1, 1]} : vector<8x36xf32> to vector<8x32xf32>
    %159 = vector.extract_strided_slice %156 {offsets = [0, 32], sizes = [8, 4], strides = [1, 1]} : vector<8x36xf32> to vector<8x4xf32>
    %cst_60 = arith.constant 9.99999974E-6 : f32
    %160 = vector.broadcast %cst_60 : f32 to vector<8x4xf32>
    %161 = arith.addf %159, %160 : vector<8x4xf32>
    %162 = tpu.reciprocal %161 {approx = true} : vector<8x4xf32> -> vector<8x4xf32>
    %163 = arith.truncf %162 : vector<8x4xf32> to vector<8x4xbf16>
    %cst_61 = arith.constant dense<0.000000e+00> : vector<8x32xf32>
    %164 = tpu.matmul %163, %8, %cst_61 {dimension_numbers = #tpu.dot_dimension_numbers<[1], [0], [0], [1], [0, 0, 1, 1], [], []>} : vector<8x4xbf16>, vector<4x32xbf16>, vector<8x32xf32> -> vector<8x32xf32>
    %165 = arith.mulf %158, %164 : vector<8x32xf32>
    %166 = arith.mulf %165, %58 : vector<8x32xf32>
    %167 = arith.addf %4, %166 : vector<8x32xf32>
    %c0_62 = arith.constant 0 : index
    %c0_63 = arith.constant 0 : index
    %168 = vector.load %arg9[%c0_62, %c0_63] : memref<1x32xf32, #tpu.memory_space<vmem>>, vector<1x32xf32>
    %c0_64 = arith.constant 0 : index
    %c0_65 = arith.constant 0 : index
    %169 = vector.load %arg10[%c0_64, %c0_65] : memref<1x32xf32, #tpu.memory_space<vmem>>, vector<1x32xf32>
    %cst_66 = arith.constant dense<0.000000e+00> : vector<8xf32>
    %170 = vector.multi_reduction <add>, %167, %cst_66 [1] : vector<8x32xf32> to vector<8xf32>
    %171 = vector.shape_cast %170 : vector<8xf32> to vector<8x1xf32>
    %cst_67 = arith.constant 3.200000e+01 : f32
    %172 = vector.broadcast %cst_67 : f32 to vector<8x1xf32>
    %173 = arith.divf %171, %172 : vector<8x1xf32>
    %174 = vector.broadcast %173 : vector<8x1xf32> to vector<8x32xf32>
    %175 = arith.subf %167, %174 : vector<8x32xf32>
    %176 = arith.mulf %175, %175 : vector<8x32xf32>
    %cst_68 = arith.constant dense<0.000000e+00> : vector<8xf32>
    %177 = vector.multi_reduction <add>, %176, %cst_68 [1] : vector<8x32xf32> to vector<8xf32>
    %178 = vector.shape_cast %177 : vector<8xf32> to vector<8x1xf32>
    %cst_69 = arith.constant 3.200000e+01 : f32
    %179 = vector.broadcast %cst_69 : f32 to vector<8x1xf32>
    %180 = arith.divf %178, %179 : vector<8x1xf32>
    %181 = vector.broadcast %173 : vector<8x1xf32> to vector<8x32xf32>
    %182 = arith.subf %167, %181 : vector<8x32xf32>
    %cst_70 = arith.constant 9.99999974E-6 : f32
    %183 = vector.broadcast %cst_70 : f32 to vector<8x1xf32>
    %184 = arith.addf %180, %183 : vector<8x1xf32>
    %185 = math.rsqrt %184 : vector<8x1xf32>
    %186 = vector.broadcast %185 : vector<8x1xf32> to vector<8x32xf32>
    %187 = arith.mulf %182, %186 : vector<8x32xf32>
    %188 = vector.broadcast %168 : vector<1x32xf32> to vector<8x32xf32>
    %189 = arith.mulf %187, %188 : vector<8x32xf32>
    %190 = vector.broadcast %169 : vector<1x32xf32> to vector<8x32xf32>
    %191 = arith.addf %189, %190 : vector<8x32xf32>
    %192 = arith.truncf %191 : vector<8x32xf32> to vector<8x32xbf16>
    %cst_71 = arith.constant 0.000000e+00 : f32
    %193 = vector.broadcast %cst_71 : f32 to vector<8x32xf32>
    %c0_i32_72 = arith.constant 0 : i32
    %194 = arith.index_cast %c0_i32_72 : i32 to index
    %c0_73 = arith.constant 0 : index
    %c0_74 = arith.constant 0 : index
    %195 = vector.load %arg11[%194, %c0_73, %c0_74] : memref<1x32x128xbf16, #tpu.memory_space<vmem>>, vector<1x32x128xbf16>
    %196 = vector.shape_cast %195 : vector<1x32x128xbf16> to vector<32x128xbf16>
    %cst_75 = arith.constant dense<0.000000e+00> : vector<8x128xf32>
    %197 = tpu.matmul %192, %196, %cst_75 {dimension_numbers = #tpu.dot_dimension_numbers<[1], [0], [0], [1], [0, 0, 1, 1], [], []>} : vector<8x32xbf16>, vector<32x128xbf16>, vector<8x128xf32> -> vector<8x128xf32>
    %cst_76 = arith.constant 5.000000e-01 : f32
    %198 = vector.broadcast %cst_76 : f32 to vector<8x128xf32>
    %199 = arith.mulf %198, %197 : vector<8x128xf32>
    %cst_77 = arith.constant 4.471500e-02 : f32
    %200 = vector.broadcast %cst_77 : f32 to vector<8x128xf32>
    %201 = arith.mulf %200, %197 : vector<8x128xf32>
    %202 = arith.mulf %201, %197 : vector<8x128xf32>
    %203 = arith.mulf %202, %197 : vector<8x128xf32>
    %204 = arith.addf %197, %203 : vector<8x128xf32>
    %cst_78 = arith.constant 0.797884583 : f32
    %205 = vector.broadcast %cst_78 : f32 to vector<8x128xf32>
    %206 = arith.mulf %205, %204 : vector<8x128xf32>
    %207 = math.tanh %206 : vector<8x128xf32>
    %cst_79 = arith.constant 1.000000e+00 : f32
    %208 = vector.broadcast %cst_79 : f32 to vector<8x128xf32>
    %209 = arith.addf %208, %207 : vector<8x128xf32>
    %210 = arith.mulf %199, %209 : vector<8x128xf32>
    %211 = arith.truncf %210 : vector<8x128xf32> to vector<8x128xbf16>
    %212 = arith.index_cast %c0_i32_72 : i32 to index
    %c0_80 = arith.constant 0 : index
    %c0_81 = arith.constant 0 : index
    %213 = vector.load %arg12[%212, %c0_80, %c0_81] : memref<1x128x32xbf16, #tpu.memory_space<vmem>>, vector<1x128x32xbf16>
    %214 = vector.shape_cast %213 : vector<1x128x32xbf16> to vector<128x32xbf16>
    %cst_82 = arith.constant dense<0.000000e+00> : vector<8x32xf32>
    %215 = tpu.matmul %211, %214, %cst_82 {dimension_numbers = #tpu.dot_dimension_numbers<[1], [0], [0], [1], [0, 0, 1, 1], [], []>} : vector<8x128xbf16>, vector<128x32xbf16>, vector<8x32xf32> -> vector<8x32xf32>
    %216 = arith.addf %193, %215 : vector<8x32xf32>
    %c1_i32 = arith.constant 1 : i32
    %217 = arith.addf %167, %216 : vector<8x32xf32>
    %c0_83 = arith.constant 0 : index
    %c0_84 = arith.constant 0 : index
    %c0_85 = arith.constant 0 : index
    %218 = vector.load %arg17[%c0_83, %c0_84, %c0_85] : memref<1x8x32xf32, #tpu.memory_space<vmem>>, vector<1x8x32xf32>
    %219 = vector.shape_cast %218 : vector<1x8x32xf32> to vector<8x32xf32>
    %220 = vector.shape_cast %217 : vector<8x32xf32> to vector<1x8x32xf32>
    tpu.vector_store %arg17[%c0_83, %c0_84, %c0_85], %220 {strides = array<i32>} : memref<1x8x32xf32, #tpu.memory_space<vmem>>, vector<1x8x32xf32>,
    return
  }
  func.func @transform_0(%arg0: i32, %arg1: i32) -> (i32, i32, i32) {
    %c0_i32 = arith.constant 0 : i32
    %c0_i32_0 = arith.constant 0 : i32
    return %arg0, %arg1, %c0_i32 : i32, i32, i32
  }
  func.func @transform_1(%arg0: i32, %arg1: i32) -> (i32, i32, i32) {
    %c0_i32 = arith.constant 0 : i32
    %c0_i32_0 = arith.constant 0 : i32
    return %arg0, %arg1, %c0_i32 : i32, i32, i32
  }
  func.func @transform_2(%arg0: i32, %arg1: i32) -> (i32, i32) {
    %c0_i32 = arith.constant 0 : i32
    %c0_i32_0 = arith.constant 0 : i32
    %c0_i32_1 = arith.constant 0 : i32
    return %c0_i32, %c0_i32_0 : i32, i32
  }
  func.func @transform_3(%arg0: i32, %arg1: i32) -> (i32, i32) {
    %c0_i32 = arith.constant 0 : i32
    %c0_i32_0 = arith.constant 0 : i32
    %c0_i32_1 = arith.constant 0 : i32
    return %c0_i32, %c0_i32_0 : i32, i32
  }
  func.func @transform_4(%arg0: i32, %arg1: i32) -> (i32, i32) {
    %c0_i32 = arith.constant 0 : i32
    %c0_i32_0 = arith.constant 0 : i32
    %c0_i32_1 = arith.constant 0 : i32
    return %c0_i32, %c0_i32_0 : i32, i32
  }
  func.func @transform_5(%arg0: i32, %arg1: i32) -> (i32, i32) {
    %c0_i32 = arith.constant 0 : i32
    %c0_i32_0 = arith.constant 0 : i32
    %c0_i32_1 = arith.constant 0 : i32
    return %c0_i32, %c0_i32_0 : i32, i32
  }
  func.func @transform_6(%arg0: i32, %arg1: i32) -> (i32, i32) {
    %c0_i32 = arith.constant 0 : i32
    %c0_i32_0 = arith.constant 0 : i32
    %c0_i32_1 = arith.constant 0 : i32
    return %c0_i32, %c0_i32_0 : i32, i32
  }
  func.func @transform_7(%arg0: i32, %arg1: i32) -> (i32, i32) {
    %c0_i32 = arith.constant 0 : i32
    %c0_i32_0 = arith.constant 0 : i32
    %c0_i32_1 = arith.constant 0 : i32
    return %c0_i32, %c0_i32_0 : i32, i32
  }
  func.func @transform_8(%arg0: i32, %arg1: i32) -> (i32, i32) {
    %c0_i32 = arith.constant 0 : i32
    %c0_i32_0 = arith.constant 0 : i32
    %c0_i32_1 = arith.constant 0 : i32
    return %c0_i32, %c0_i32_0 : i32, i32
  }
  func.func @transform_9(%arg0: i32, %arg1: i32) -> (i32, i32, i32) {
    %c0_i32 = arith.constant 0 : i32
    %c0_i32_0 = arith.constant 0 : i32
    %c0_i32_1 = arith.constant 0 : i32
    %c0_i32_2 = arith.constant 0 : i32
    return %c0_i32, %c0_i32_0, %c0_i32_1 : i32, i32, i32
  }
  func.func @transform_10(%arg0: i32, %arg1: i32) -> (i32, i32, i32) {
    %c0_i32 = arith.constant 0 : i32
    %c0_i32_0 = arith.constant 0 : i32
    %c0_i32_1 = arith.constant 0 : i32
    %c0_i32_2 = arith.constant 0 : i32
    return %c0_i32, %c0_i32_0, %c0_i32_1 : i32, i32, i32
  }
  func.func @transform_11(%arg0: i32, %arg1: i32) -> (i32, i32) {
    %c0_i32 = arith.constant 0 : i32
    %c0_i32_0 = arith.constant 0 : i32
    %c0_i32_1 = arith.constant 0 : i32
    return %c0_i32, %c0_i32_0 : i32, i32
  }
  func.func @transform_12(%arg0: i32, %arg1: i32) -> (i32, i32) {
    %c0_i32 = arith.constant 0 : i32
    %c0_i32_0 = arith.constant 0 : i32
    %c0_i32_1 = arith.constant 0 : i32
    return %c0_i32, %c0_i32_0 : i32, i32
  }
  func.func @transform_13(%arg0: i32, %arg1: i32) -> (i32, i32) {
    %c0_i32 = arith.constant 0 : i32
    %c0_i32_0 = arith.constant 0 : i32
    %c0_i32_1 = arith.constant 0 : i32
    return %c0_i32, %c0_i32_0 : i32, i32
  }
  func.func @transform_14(%arg0: i32, %arg1: i32) -> (i32, i32) {
    %c0_i32 = arith.constant 0 : i32
    %c0_i32_0 = arith.constant 0 : i32
    %c0_i32_1 = arith.constant 0 : i32
    return %c0_i32, %c0_i32_0 : i32, i32
  }
  func.func @transform_15(%arg0: i32, %arg1: i32) -> (i32, i32, i32) {
    %c0_i32 = arith.constant 0 : i32
    %c0_i32_0 = arith.constant 0 : i32
    return %arg0, %arg1, %c0_i32 : i32, i32, i32
  }
}

</mosaic_0001>

<llo_original>
// kernel: tpu_custom_call.1
$region0: #{tpu_custom_call.1}
  #allocation0 [shape = 'u32[]', space=smem, size = 0x4, offset = 0x4, fixed_abs, tag = 'smem constant byte address 0x4 - core index']
  #allocation1 [shape = 'u32[144,128]{1,0:T(1,128)}', space=vmem, size = 0x12000, scoped, tag = 'internal scratch']
  #allocation2 [shape = 'bf16[8,36]{1,0:T(8,128)(2,1)}', space=vmem, size = 0x800, scoped, tag = 'scratch operand']
  #allocation3 [shape = 'bf16[8,36]{1,0:T(8,128)(2,1)}', space=vmem, size = 0x800, scoped, tag = 'scratch operand']
  %s0 = inlined_call_operand.vmem [shape: f32[2,8,1], index: 0, kind: input, shape index: {}]
  %s1 = inlined_call_operand.vmem [shape: f32[2,8,32], index: 1, kind: input, shape index: {}]
  %s2 = inlined_call_operand.vmem [shape: bf16[32,96], index: 2, kind: input, shape index: {}]
  %s3 = inlined_call_operand.vmem [shape: f32[1,32], index: 3, kind: input, shape index: {}]
  %s4 = inlined_call_operand.vmem [shape: f32[1,32], index: 4, kind: input, shape index: {}]
  %s5 = inlined_call_operand.vmem [shape: f32[1,32], index: 5, kind: input, shape index: {}]
  %s6 = inlined_call_operand.vmem [shape: f32[1,32], index: 6, kind: input, shape index: {}]
  %s7 = inlined_call_operand.vmem [shape: f32[1,32], index: 7, kind: input, shape index: {}]
  %s8 = inlined_call_operand.vmem [shape: f32[1,32], index: 8, kind: input, shape index: {}]
  %s9 = inlined_call_operand.vmem [shape: bf16[1,32,128], index: 9, kind: input, shape index: {}]
  %s10 = inlined_call_operand.vmem [shape: bf16[1,128,32], index: 10, kind: input, shape index: {}]
  %s11 = inlined_call_operand.vmem [shape: bf16[32,4], index: 11, kind: input, shape index: {}]
  %s12 = inlined_call_operand.vmem [shape: bf16[4,32], index: 12, kind: input, shape index: {}]
  %s13 = inlined_call_operand.vmem [shape: bf16[64,8], index: 13, kind: input, shape index: {}]
  %s14 = inlined_call_operand.vmem [shape: bf16[8,64], index: 14, kind: input, shape index: {}]
  %s15 = inlined_call_operand.hbm [shape: f32[2,8,32], index: 15, kind: output, shape index: {}]
  %s16 = sld [smem:[#allocation0]]
  $region97: #{tpu_custom_call.1} parent=0
    _
  %s18 = ssub.s32 1, %s16
  %s19 = scalar_select 0, %s18, %s16
  $region1: #{tpu_custom_call.1} parent=0
    #allocation4 [shape = 'u8[8192]{0}', space=vmem, size = 0x2000, scoped, tag = 'output window, operand 0']
    #allocation5 [shape = 's32[2]{0}', space=sflag, size = 0x8, scoped, tag = 'scoped memory for tpu_custom_call.1']
    %20 = vsyncpa [#allocation5], 0
    %s21 = scalar_lea.sflag [#allocation5], 1
    %22 = vsyncpa %s21, 0
    loop: start=0, step=1, limit=4
    $region2: #{tpu_custom_call.1} parent=1 // loop_pre_header
      _
    $region3: #{tpu_custom_call.1} parent=1 // loop_header
      %s24 = sphi 0, %s28
      %p25 = scmp.ge.s32.totalorder %s24, 4
      %s31 = sphi 0, %s43
      %s32 = sphi 0, %s39
      %s33 = sphi 0, %s31
      %s34 = sphi 0, %s32
      %s35 = sphi 0, %s33
      %s36 = sphi 0, %s34
      %s48 = sphi 0, %s50
      %s51 = sphi 0, %s48
      %s52 = sphi 0, %s51
      %s68 = sphi 0, %s52
      %s76 = sphi 0, %s78
      %s79 = sphi 0, %s76
      %s80 = sphi 0, %s79
      %s96 = sphi 0, %s80
      %s100 = sphi 0, %s100
      %s102 = sphi 0, %s100
      %s103 = sphi 0, %s102
      %s117 = sphi 0, %s103
      %s121 = sphi 0, %s121
      %s123 = sphi 0, %s121
      %s124 = sphi 0, %s123
      %s138 = sphi 0, %s124
      %s142 = sphi 0, %s142
      %s144 = sphi 0, %s142
      %s145 = sphi 0, %s144
      %s159 = sphi 0, %s145
      %s163 = sphi 0, %s163
      %s165 = sphi 0, %s163
      %s166 = sphi 0, %s165
      %s180 = sphi 0, %s166
      %s184 = sphi 0, %s184
      %s186 = sphi 0, %s184
      %s187 = sphi 0, %s186
      %s201 = sphi 0, %s187
      %s205 = sphi 0, %s205
      %s207 = sphi 0, %s205
      %s208 = sphi 0, %s207
      %s222 = sphi 0, %s208
      %s226 = sphi 0, %s226
      %s228 = sphi 0, %s226
      %s229 = sphi 0, %s228
      %s243 = sphi 0, %s229
      %s247 = sphi 0, %s247
      %s249 = sphi 0, %s247
      %s250 = sphi 0, %s249
      %s264 = sphi 0, %s250
      %s268 = sphi 0, %s268
      %s270 = sphi 0, %s268
      %s271 = sphi 0, %s270
      %s285 = sphi 0, %s271
      %s289 = sphi 0, %s289
      %s291 = sphi 0, %s289
      %s292 = sphi 0, %s291
      %s306 = sphi 0, %s292
      %s310 = sphi 0, %s310
      %s312 = sphi 0, %s310
      %s313 = sphi 0, %s312
      %s327 = sphi 0, %s313
      %s331 = sphi 0, %s331
      %s333 = sphi 0, %s331
      %s334 = sphi 0, %s333
      %s348 = sphi 0, %s334
      %s352 = sphi 0, %s352
      %s354 = sphi 0, %s352
      %s355 = sphi 0, %s354
      %s369 = sphi 0, %s355
      %s377 = sphi 0, %s379
      %s380 = sphi 0, %s377
      %s381 = sphi 0, %s380
      %s397 = sphi 0, %s381
    $region4: #{tpu_custom_call.1} parent=1 // loop_header_branch
      %27 = sbr.rel (%p25) target = $region8
    $region5: #{tpu_custom_call.1} parent=1 // loop_body
      %s29 = ssub.s32 %s24, 1
      %s30 = ssub.s32 %s24, 2
      %s37 = sadd.s32 1, %s32
      %p38 = scmp.ge.s32.totalorder %s37, 1
      %s39 = scalar_select %p38, 0, %s37
      %s40 = sadd.s32 1, %s31
      %s41 = scalar_select %p38, %s40, %s31
      %p42 = scmp.ge.s32.totalorder %s41, 2
      %s43 = scalar_select %p42, 0, %s41
      %s44 = ssub.s32 %s31, %s43
      %s45 = ssub.s32 %s32, %s39
      %s46 = sor.u32 %s44, %s45
      %p47 = scmp.eq.s32.totalorder %s46, 0
      %s49 = sadd.s32 %s48, 1
      %s50 = scalar_select %p47, %s48, %s49
      %p53 = pneg %p47
      %p54 = scmp.eq.s32.totalorder %s24, 1
      %p55 = por %p53, %p54
      %p56 = scmp.ne.s32.totalorder %s48, %s51
      %p57 = scmp.eq.s32.totalorder %s24, 0
      %p58 = por %p56, %p57
      %p59 = scmp.ne.s32.totalorder %s48, %s51
      %p60 = scmp.eq.s32.totalorder %s29, 1
      %p61 = por %p59, %p60
      %p62 = scmp.ne.s32.totalorder %s51, %s52
      %p63 = scmp.eq.s32.totalorder %s29, 0
      %p64 = por %p62, %p63
      %p65 = scmp.ne.s32.totalorder %s51, %s52
      %p66 = scmp.eq.s32.totalorder %s30, 1
      %p67 = por %p65, %p66
      %p69 = scmp.ne.s32.totalorder %s52, %s68
      %p70 = scmp.eq.s32.totalorder %s30, 0
      %p71 = por %p69, %p70
      %s72 = ssub.s32 %s31, %s43
      %s73 = ssub.s32 %s32, %s39
      %s74 = sor.u32 %s72, %s73
      %p75 = scmp.eq.s32.totalorder %s74, 0
      %s77 = sadd.s32 %s76, 1
      %s78 = scalar_select %p75, %s76, %s77
      %p81 = pneg %p75
      %p82 = scmp.eq.s32.totalorder %s24, 1
      %p83 = por %p81, %p82
      %p84 = scmp.ne.s32.totalorder %s76, %s79
      %p85 = scmp.eq.s32.totalorder %s24, 0
      %p86 = por %p84, %p85
      %p87 = scmp.ne.s32.totalorder %s76, %s79
      %p88 = scmp.eq.s32.totalorder %s29, 1
      %p89 = por %p87, %p88
      %p90 = scmp.ne.s32.totalorder %s79, %s80
      %p91 = scmp.eq.s32.totalorder %s29, 0
      %p92 = por %p90, %p91
      %p93 = scmp.ne.s32.totalorder %s79, %s80
      %p94 = scmp.eq.s32.totalorder %s30, 1
      %p95 = por %p93, %p94
      %p97 = scmp.ne.s32.totalorder %s80, %s96
      %p98 = scmp.eq.s32.totalorder %s30, 0
      %p99 = por %p97, %p98
      %s101 = sadd.s32 %s100, 1
      %p104 = scmp.eq.s32.totalorder %s24, 1
      %p105 = scmp.ne.s32.totalorder %s100, %s102
      %p106 = scmp.eq.s32.totalorder %s24, 0
      %p107 = por %p105, %p106
      %p108 = scmp.ne.s32.totalorder %s100, %s102
      %p109 = scmp.eq.s32.totalorder %s29, 1
      %p110 = por %p108, %p109
      %p111 = scmp.ne.s32.totalorder %s102, %s103
      %p112 = scmp.eq.s32.totalorder %s29, 0
      %p113 = por %p111, %p112
      %p114 = scmp.ne.s32.totalorder %s102, %s103
      %p115 = scmp.eq.s32.totalorder %s30, 1
      %p116 = por %p114, %p115
      %p118 = scmp.ne.s32.totalorder %s103, %s117
      %p119 = scmp.eq.s32.totalorder %s30, 0
      %p120 = por %p118, %p119
      %s122 = sadd.s32 %s121, 1
      %p125 = scmp.eq.s32.totalorder %s24, 1
      %p126 = scmp.ne.s32.totalorder %s121, %s123
      %p127 = scmp.eq.s32.totalorder %s24, 0
      %p128 = por %p126, %p127
      %p129 = scmp.ne.s32.totalorder %s121, %s123
      %p130 = scmp.eq.s32.totalorder %s29, 1
      %p131 = por %p129, %p130
      %p132 = scmp.ne.s32.totalorder %s123, %s124
      %p133 = scmp.eq.s32.totalorder %s29, 0
      %p134 = por %p132, %p133
      %p135 = scmp.ne.s32.totalorder %s123, %s124
      %p136 = scmp.eq.s32.totalorder %s30, 1
      %p137 = por %p135, %p136
      %p139 = scmp.ne.s32.totalorder %s124, %s138
      %p140 = scmp.eq.s32.totalorder %s30, 0
      %p141 = por %p139, %p140
      %s143 = sadd.s32 %s142, 1
      %p146 = scmp.eq.s32.totalorder %s24, 1
      %p147 = scmp.ne.s32.totalorder %s142, %s144
      %p148 = scmp.eq.s32.totalorder %s24, 0
      %p149 = por %p147, %p148
      %p150 = scmp.ne.s32.totalorder %s142, %s144
      %p151 = scmp.eq.s32.totalorder %s29, 1
      %p152 = por %p150, %p151
      %p153 = scmp.ne.s32.totalorder %s144, %s145
      %p154 = scmp.eq.s32.totalorder %s29, 0
      %p155 = por %p153, %p154
      %p156 = scmp.ne.s32.totalorder %s144, %s145
      %p157 = scmp.eq.s32.totalorder %s30, 1
      %p158 = por %p156, %p157
      %p160 = scmp.ne.s32.totalorder %s145, %s159
      %p161 = scmp.eq.s32.totalorder %s30, 0
      %p162 = por %p160, %p161
      %s164 = sadd.s32 %s163, 1
      %p167 = scmp.eq.s32.totalorder %s24, 1
      %p168 = scmp.ne.s32.totalorder %s163, %s165
      %p169 = scmp.eq.s32.totalorder %s24, 0
      %p170 = por %p168, %p169
      %p171 = scmp.ne.s32.totalorder %s163, %s165
      %p172 = scmp.eq.s32.totalorder %s29, 1
      %p173 = por %p171, %p172
      %p174 = scmp.ne.s32.totalorder %s165, %s166
      %p175 = scmp.eq.s32.totalorder %s29, 0
      %p176 = por %p174, %p175
      %p177 = scmp.ne.s32.totalorder %s165, %s166
      %p178 = scmp.eq.s32.totalorder %s30, 1
      %p179 = por %p177, %p178
      %p181 = scmp.ne.s32.totalorder %s166, %s180
      %p182 = scmp.eq.s32.totalorder %s30, 0
      %p183 = por %p181, %p182
      %s185 = sadd.s32 %s184, 1
      %p188 = scmp.eq.s32.totalorder %s24, 1
      %p189 = scmp.ne.s32.totalorder %s184, %s186
      %p190 = scmp.eq.s32.totalorder %s24, 0
      %p191 = por %p189, %p190
      %p192 = scmp.ne.s32.totalorder %s184, %s186
      %p193 = scmp.eq.s32.totalorder %s29, 1
      %p194 = por %p192, %p193
      %p195 = scmp.ne.s32.totalorder %s186, %s187
      %p196 = scmp.eq.s32.totalorder %s29, 0
      %p197 = por %p195, %p196
      %p198 = scmp.ne.s32.totalorder %s186, %s187
      %p199 = scmp.eq.s32.totalorder %s30, 1
      %p200 = por %p198, %p199
      %p202 = scmp.ne.s32.totalorder %s187, %s201
      %p203 = scmp.eq.s32.totalorder %s30, 0
      %p204 = por %p202, %p203
      %s206 = sadd.s32 %s205, 1
      %p209 = scmp.eq.s32.totalorder %s24, 1
      %p210 = scmp.ne.s32.totalorder %s205, %s207
      %p211 = scmp.eq.s32.totalorder %s24, 0
      %p212 = por %p210, %p211
      %p213 = scmp.ne.s32.totalorder %s205, %s207
      %p214 = scmp.eq.s32.totalorder %s29, 1
      %p215 = por %p213, %p214
      %p216 = scmp.ne.s32.totalorder %s207, %s208
      %p217 = scmp.eq.s32.totalorder %s29, 0
      %p218 = por %p216, %p217
      %p219 = scmp.ne.s32.totalorder %s207, %s208
      %p220 = scmp.eq.s32.totalorder %s30, 1
      %p221 = por %p219, %p220
      %p223 = scmp.ne.s32.totalorder %s208, %s222
      %p224 = scmp.eq.s32.totalorder %s30, 0
      %p225 = por %p223, %p224
      %s227 = sadd.s32 %s226, 1
      %p230 = scmp.eq.s32.totalorder %s24, 1
      %p231 = scmp.ne.s32.totalorder %s226, %s228
      %p232 = scmp.eq.s32.totalorder %s24, 0
      %p233 = por %p231, %p232
      %p234 = scmp.ne.s32.totalorder %s226, %s228
      %p235 = scmp.eq.s32.totalorder %s29, 1
      %p236 = por %p234, %p235
      %p237 = scmp.ne.s32.totalorder %s228, %s229
      %p238 = scmp.eq.s32.totalorder %s29, 0
      %p239 = por %p237, %p238
      %p240 = scmp.ne.s32.totalorder %s228, %s229
      %p241 = scmp.eq.s32.totalorder %s30, 1
      %p242 = por %p240, %p241
      %p244 = scmp.ne.s32.totalorder %s229, %s243
      %p245 = scmp.eq.s32.totalorder %s30, 0
      %p246 = por %p244, %p245
      %s248 = sadd.s32 %s247, 1
      %p251 = scmp.eq.s32.totalorder %s24, 1
      %p252 = scmp.ne.s32.totalorder %s247, %s249
      %p253 = scmp.eq.s32.totalorder %s24, 0
      %p254 = por %p252, %p253
      %p255 = scmp.ne.s32.totalorder %s247, %s249
      %p256 = scmp.eq.s32.totalorder %s29, 1
      %p257 = por %p255, %p256
      %p258 = scmp.ne.s32.totalorder %s249, %s250
      %p259 = scmp.eq.s32.totalorder %s29, 0
      %p260 = por %p258, %p259
      %p261 = scmp.ne.s32.totalorder %s249, %s250
      %p262 = scmp.eq.s32.totalorder %s30, 1
      %p263 = por %p261, %p262
      %p265 = scmp.ne.s32.totalorder %s250, %s264
      %p266 = scmp.eq.s32.totalorder %s30, 0
      %p267 = por %p265, %p266
      %s269 = sadd.s32 %s268, 1
      %p272 = scmp.eq.s32.totalorder %s24, 1
      %p273 = scmp.ne.s32.totalorder %s268, %s270
      %p274 = scmp.eq.s32.totalorder %s24, 0
      %p275 = por %p273, %p274
      %p276 = scmp.ne.s32.totalorder %s268, %s270
      %p277 = scmp.eq.s32.totalorder %s29, 1
      %p278 = por %p276, %p277
      %p279 = scmp.ne.s32.totalorder %s270, %s271
      %p280 = scmp.eq.s32.totalorder %s29, 0
      %p281 = por %p279, %p280
      %p282 = scmp.ne.s32.totalorder %s270, %s271
      %p283 = scmp.eq.s32.totalorder %s30, 1
      %p284 = por %p282, %p283
      %p286 = scmp.ne.s32.totalorder %s271, %s285
      %p287 = scmp.eq.s32.totalorder %s30, 0
      %p288 = por %p286, %p287
      %s290 = sadd.s32 %s289, 1
      %p293 = scmp.eq.s32.totalorder %s24, 1
      %p294 = scmp.ne.s32.totalorder %s289, %s291
      %p295 = scmp.eq.s32.totalorder %s24, 0
      %p296 = por %p294, %p295
      %p297 = scmp.ne.s32.totalorder %s289, %s291
      %p298 = scmp.eq.s32.totalorder %s29, 1
      %p299 = por %p297, %p298
      %p300 = scmp.ne.s32.totalorder %s291, %s292
      %p301 = scmp.eq.s32.totalorder %s29, 0
      %p302 = por %p300, %p301
      %p303 = scmp.ne.s32.totalorder %s291, %s292
      %p304 = scmp.eq.s32.totalorder %s30, 1
      %p305 = por %p303, %p304
      %p307 = scmp.ne.s32.totalorder %s292, %s306
      %p308 = scmp.eq.s32.totalorder %s30, 0
      %p309 = por %p307, %p308
      %s311 = sadd.s32 %s310, 1
      %p314 = scmp.eq.s32.totalorder %s24, 1
      %p315 = scmp.ne.s32.totalorder %s310, %s312
      %p316 = scmp.eq.s32.totalorder %s24, 0
      %p317 = por %p315, %p316
      %p318 = scmp.ne.s32.totalorder %s310, %s312
      %p319 = scmp.eq.s32.totalorder %s29, 1
      %p320 = por %p318, %p319
      %p321 = scmp.ne.s32.totalorder %s312, %s313
      %p322 = scmp.eq.s32.totalorder %s29, 0
      %p323 = por %p321, %p322
      %p324 = scmp.ne.s32.totalorder %s312, %s313
      %p325 = scmp.eq.s32.totalorder %s30, 1
      %p326 = por %p324, %p325
      %p328 = scmp.ne.s32.totalorder %s313, %s327
      %p329 = scmp.eq.s32.totalorder %s30, 0
      %p330 = por %p328, %p329
      %s332 = sadd.s32 %s331, 1
      %p335 = scmp.eq.s32.totalorder %s24, 1
      %p336 = scmp.ne.s32.totalorder %s331, %s333
      %p337 = scmp.eq.s32.totalorder %s24, 0
      %p338 = por %p336, %p337
      %p339 = scmp.ne.s32.totalorder %s331, %s333
      %p340 = scmp.eq.s32.totalorder %s29, 1
      %p341 = por %p339, %p340
      %p342 = scmp.ne.s32.totalorder %s333, %s334
      %p343 = scmp.eq.s32.totalorder %s29, 0
      %p344 = por %p342, %p343
      %p345 = scmp.ne.s32.totalorder %s333, %s334
      %p346 = scmp.eq.s32.totalorder %s30, 1
      %p347 = por %p345, %p346
      %p349 = scmp.ne.s32.totalorder %s334, %s348
      %p350 = scmp.eq.s32.totalorder %s30, 0
      %p351 = por %p349, %p350
      %s353 = sadd.s32 %s352, 1
      %p356 = scmp.eq.s32.totalorder %s24, 1
      %p357 = scmp.ne.s32.totalorder %s352, %s354
      %p358 = scmp.eq.s32.totalorder %s24, 0
      %p359 = por %p357, %p358
      %p360 = scmp.ne.s32.totalorder %s352, %s354
      %p361 = scmp.eq.s32.totalorder %s29, 1
      %p362 = por %p360, %p361
      %p363 = scmp.ne.s32.totalorder %s354, %s355
      %p364 = scmp.eq.s32.totalorder %s29, 0
      %p365 = por %p363, %p364
      %p366 = scmp.ne.s32.totalorder %s354, %s355
      %p367 = scmp.eq.s32.totalorder %s30, 1
      %p368 = por %p366, %p367
      %p370 = scmp.ne.s32.totalorder %s355, %s369
      %p371 = scmp.eq.s32.totalorder %s30, 0
      %p372 = por %p370, %p371
      %s373 = ssub.s32 %s31, %s43
      %s374 = ssub.s32 %s32, %s39
      %s375 = sor.u32 %s373, %s374
      %p376 = scmp.eq.s32.totalorder %s375, 0
      %s378 = sadd.s32 %s377, 1
      %s379 = scalar_select %p376, %s377, %s378
      %p382 = pneg %p376
      %p383 = scmp.eq.s32.totalorder %s24, 1
      %p384 = por %p382, %p383
      %p385 = scmp.ne.s32.totalorder %s377, %s380
      %p386 = scmp.eq.s32.totalorder %s24, 0
      %p387 = por %p385, %p386
      %p388 = scmp.ne.s32.totalorder %s377, %s380
      %p389 = scmp.eq.s32.totalorder %s29, 1
      %p390 = por %p388, %p389
      %p391 = scmp.ne.s32.totalorder %s380, %s381
      %p392 = scmp.eq.s32.totalorder %s29, 0
      %p393 = por %p391, %p392
      %p394 = scmp.ne.s32.totalorder %s380, %s381
      %p395 = scmp.eq.s32.totalorder %s30, 1
      %p396 = por %p394, %p395
      %p398 = scmp.ne.s32.totalorder %s381, %s397
      %p399 = scmp.eq.s32.totalorder %s30, 0
      %p400 = por %p398, %p399
      %p401 = scmp.le.s32.totalorder 1, %s24
      %p402 = scmp.lt.s32.totalorder %s24, 3
      %p403 = pnand %p401, %p402
      %p404 = pneg %p403
      // Predicated region
      $region9: #{tpu_custom_call.1} parent=5 // pred_check
        _
      $region10: #{tpu_custom_call.1} parent=5 // pred_check_branch
        %406 = sbr.rel (%p403) target = $region12
      $region11: #{tpu_custom_call.1} parent=5 // pred_region
        %s407 = ssub.s32 %s24, 1
        // Predicated region
        $region13: #{tpu_custom_call.1} parent=11 // pred_check
          %p408 = pneg %p113
        $region14: #{tpu_custom_call.1} parent=11 // pred_check_branch
          %410 = sbr.rel (%p408) target = $region16
        $region15: #{tpu_custom_call.1} parent=11 // pred_region
          _
        $region16: #{tpu_custom_call.1} parent=11 // pred_fallthru
          _
        // Predicated region
        $region17: #{tpu_custom_call.1} parent=11 // pred_check
          %p411 = pneg %p134
        $region18: #{tpu_custom_call.1} parent=11 // pred_check_branch
          %413 = sbr.rel (%p411) target = $region20
        $region19: #{tpu_custom_call.1} parent=11 // pred_region
          _
        $region20: #{tpu_custom_call.1} parent=11 // pred_fallthru
          _
        // Predicated region
        $region21: #{tpu_custom_call.1} parent=11 // pred_check
          %p414 = pneg %p155
        $region22: #{tpu_custom_call.1} parent=11 // pred_check_branch
          %416 = sbr.rel (%p414) target = $region24
        $region23: #{tpu_custom_call.1} parent=11 // pred_region
          _
        $region24: #{tpu_custom_call.1} parent=11 // pred_fallthru
          _
        // Predicated region
        $region25: #{tpu_custom_call.1} parent=11 // pred_check
          %p417 = pneg %p176
        $region26: #{tpu_custom_call.1} parent=11 // pred_check_branch
          %419 = sbr.rel (%p417) target = $region28
        $region27: #{tpu_custom_call.1} parent=11 // pred_region
          _
        $region28: #{tpu_custom_call.1} parent=11 // pred_fallthru
          _
        // Predicated region
        $region29: #{tpu_custom_call.1} parent=11 // pred_check
          %p420 = pneg %p197
        $region30: #{tpu_custom_call.1} parent=11 // pred_check_branch
          %422 = sbr.rel (%p420) target = $region32
        $region31: #{tpu_custom_call.1} parent=11 // pred_region
          _
        $region32: #{tpu_custom_call.1} parent=11 // pred_fallthru
          _
        // Predicated region
        $region33: #{tpu_custom_call.1} parent=11 // pred_check
          %p423 = pneg %p218
        $region34: #{tpu_custom_call.1} parent=11 // pred_check_branch
          %425 = sbr.rel (%p423) target = $region36
        $region35: #{tpu_custom_call.1} parent=11 // pred_region
          _
        $region36: #{tpu_custom_call.1} parent=11 // pred_fallthru
          _
        // Predicated region
        $region37: #{tpu_custom_call.1} parent=11 // pred_check
          %p426 = pneg %p239
        $region38: #{tpu_custom_call.1} parent=11 // pred_check_branch
          %428 = sbr.rel (%p426) target = $region40
        $region39: #{tpu_custom_call.1} parent=11 // pred_region
          _
        $region40: #{tpu_custom_call.1} parent=11 // pred_fallthru
          _
        // Predicated region
        $region41: #{tpu_custom_call.1} parent=11 // pred_check
          %p429 = pneg %p260
        $region42: #{tpu_custom_call.1} parent=11 // pred_check_branch
          %431 = sbr.rel (%p429) target = $region44
        $region43: #{tpu_custom_call.1} parent=11 // pred_region
          _
        $region44: #{tpu_custom_call.1} parent=11 // pred_fallthru
          _
        // Predicated region
        $region45: #{tpu_custom_call.1} parent=11 // pred_check
          %p432 = pneg %p281
        $region46: #{tpu_custom_call.1} parent=11 // pred_check_branch
          %434 = sbr.rel (%p432) target = $region48
        $region47: #{tpu_custom_call.1} parent=11 // pred_region
          _
        $region48: #{tpu_custom_call.1} parent=11 // pred_fallthru
          _
        // Predicated region
        $region49: #{tpu_custom_call.1} parent=11 // pred_check
          %p435 = pneg %p302
        $region50: #{tpu_custom_call.1} parent=11 // pred_check_branch
          %437 = sbr.rel (%p435) target = $region52
        $region51: #{tpu_custom_call.1} parent=11 // pred_region
          _
        $region52: #{tpu_custom_call.1} parent=11 // pred_fallthru
          _
        // Predicated region
        $region53: #{tpu_custom_call.1} parent=11 // pred_check
          %p438 = pneg %p323
        $region54: #{tpu_custom_call.1} parent=11 // pred_check_branch
          %440 = sbr.rel (%p438) target = $region56
        $region55: #{tpu_custom_call.1} parent=11 // pred_region
          _
        $region56: #{tpu_custom_call.1} parent=11 // pred_fallthru
          _
        // Predicated region
        $region57: #{tpu_custom_call.1} parent=11 // pred_check
          %p441 = pneg %p344
        $region58: #{tpu_custom_call.1} parent=11 // pred_check_branch
          %443 = sbr.rel (%p441) target = $region60
        $region59: #{tpu_custom_call.1} parent=11 // pred_region
          _
        $region60: #{tpu_custom_call.1} parent=11 // pred_fallthru
          _
        // Predicated region
        $region61: #{tpu_custom_call.1} parent=11 // pred_check
          %p444 = pneg %p365
        $region62: #{tpu_custom_call.1} parent=11 // pred_check_branch
          %446 = sbr.rel (%p444) target = $region64
        $region63: #{tpu_custom_call.1} parent=11 // pred_region
          _
        $region64: #{tpu_custom_call.1} parent=11 // pred_fallthru
          _
      $region12: #{tpu_custom_call.1} parent=5 // pred_fallthru
        _
      %p447 = scmp.lt.s32.totalorder %s24, 2
      // Predicated region
      $region65: #{tpu_custom_call.1} parent=5 // pred_check
        %p448 = pneg %p447
      $region66: #{tpu_custom_call.1} parent=5 // pred_check_branch
        %450 = sbr.rel (%p448) target = $region68
      $region67: #{tpu_custom_call.1} parent=5 // pred_region
        // Predicated region
        $region69: #{tpu_custom_call.1} parent=67 // pred_check
          %p451 = pneg %p58
        $region70: #{tpu_custom_call.1} parent=67 // pred_check_branch
          %453 = sbr.rel (%p451) target = $region72
        $region71: #{tpu_custom_call.1} parent=67 // pred_region
          %p454 = scmp.lt.s32.totalorder %s31, 1
          %s455 = scalar_select %p454, %s31, 1
          %p456 = scmp.lt.s32.totalorder %s32, 0
          %s457 = scalar_select %p456, %s32, 0
          %s458 = sadd.s32 %s457, %s455
          %s459 = smul.addr %s458, 8
          %s460 = scalar_lea.vmem %s0, %s459
        $region72: #{tpu_custom_call.1} parent=67 // pred_fallthru
          _
        // Predicated region
        $region73: #{tpu_custom_call.1} parent=67 // pred_check
          %p461 = pneg %p86
        $region74: #{tpu_custom_call.1} parent=67 // pred_check_branch
          %463 = sbr.rel (%p461) target = $region76
        $region75: #{tpu_custom_call.1} parent=67 // pred_region
          %p464 = scmp.lt.s32.totalorder %s31, 1
          %s465 = scalar_select %p464, %s31, 1
          %p466 = scmp.lt.s32.totalorder %s32, 0
          %s467 = scalar_select %p466, %s32, 0
          %s468 = sadd.s32 %s467, %s465
          %s469 = smul.addr %s468, 8
          %s470 = scalar_lea.vmem %s1, %s469
        $region76: #{tpu_custom_call.1} parent=67 // pred_fallthru
          _
      $region68: #{tpu_custom_call.1} parent=5 // pred_fallthru
        _
      %p471 = scmp.le.s32.totalorder 1, %s24
      %p472 = scmp.lt.s32.totalorder %s24, 3
      %p473 = pnand %p471, %p472
      %p474 = pneg %p473
      // Predicated region
      $region77: #{tpu_custom_call.1} parent=5 // pred_check
        _
      $region78: #{tpu_custom_call.1} parent=5 // pred_check_branch
        %476 = sbr.rel (%p473) target = $region80
      $region79: #{tpu_custom_call.1} parent=5 // pred_region
        %s477 = ssub.s32 %s24, 1
        %p478 = scmp.lt.s32.totalorder %s33, 1
        %s479 = scalar_select %p478, %s33, 1
        %p480 = scmp.lt.s32.totalorder %s34, 0
        %s481 = scalar_select %p480, %s34, 0
        %s482 = sadd.s32 %s481, %s479
        %s483 = smul.addr %s482, 8
        %s484 = scalar_lea.vmem %s0, %s483
        %p485 = pneg %p64
        %p486 = pneg %p61
        %p487 = scmp.lt.s32.totalorder %s33, 1
        %s488 = scalar_select %p487, %s33, 1
        %p489 = scmp.lt.s32.totalorder %s34, 0
        %s490 = scalar_select %p489, %s34, 0
        %s491 = sadd.s32 %s490, %s488
        %s492 = smul.addr %s491, 8
        %s493 = scalar_lea.vmem %s1, %s492
        %p494 = pneg %p92
        %p495 = pneg %p89
        %p496 = pneg %p113
        %p497 = pneg %p110
        %p498 = pneg %p134
        %p499 = pneg %p131
        %p500 = pneg %p155
        %p501 = pneg %p152
        %p502 = pneg %p176
        %p503 = pneg %p173
        %p504 = pneg %p197
        %p505 = pneg %p194
        %p506 = pneg %p218
        %p507 = pneg %p215
        %p508 = pneg %p239
        %p509 = pneg %p236
        %p510 = pneg %p260
        %p511 = pneg %p257
        %p512 = pneg %p281
        %p513 = pneg %p278
        %p514 = pneg %p302
        %p515 = pneg %p299
        %p516 = pneg %p323
        %p517 = pneg %p320
        %p518 = pneg %p344
        %p519 = pneg %p341
        %p520 = pneg %p365
        %p521 = pneg %p362
        %p522 = pneg %p393
        %p523 = pneg %p390
        %s524 = sand.u32 %s380, 1
        %s525 = scalar_lea.sflag [#allocation5], %s524
        %s526 = sand.u32 %s380, 1
        %s527 = smul.addr %s526, 8
        %s528 = scalar_lea.vmem [#allocation4], %s527
        %p529 = scmp.lt.s32.totalorder %s33, 1
        %s530 = scalar_select %p529, %s33, 1
        %p531 = scmp.lt.s32.totalorder %s34, 0
        %s532 = scalar_select %p531, %s34, 0
        %s533 = sadd.s32 %s532, %s530
        %s534 = smul.addr %s533, 8
        %s535 = scalar_lea.vmem %s0, %s534
        %p536 = scmp.lt.s32.totalorder %s33, 1
        %s537 = scalar_select %p536, %s33, 1
        %p538 = scmp.lt.s32.totalorder %s34, 0
        %s539 = scalar_select %p538, %s34, 0
        %s540 = sadd.s32 %s539, %s537
        %s541 = smul.addr %s540, 8
        %s542 = scalar_lea.vmem %s1, %s541
        %p544 = scmp.eq.s32.totalorder %s34, 0
        // Predicated region
        $region81: #{tpu_custom_call.1} parent=79 // pred_check
          %p545 = pneg %p544
        $region82: #{tpu_custom_call.1} parent=79 // pred_check_branch
          %547 = sbr.rel (%p545) target = $region84
        $region83: #{tpu_custom_call.1} parent=79 // pred_region
          %vm548 = vcmask 289792
          %549 = vst.msk [vmem:[#allocation2] sm:$0xf] %vm548, 0
          %550 = vst.msk [vmem:[#allocation3] sm:$0xf] %vm548, 0
        $region84: #{tpu_custom_call.1} parent=79 // pred_fallthru
          _
        %v551 = vld [vmem:[%s542] sm:$0xff]
        %v552 = vld [vmem:[%s535] sm:$0xff]
        %v553 = vld [vmem:[%s11] sm:$0xf]
        %v554 = vld [vmem:[%s11 + $0x4] sm:$0xf]
        %v555 = vld [vmem:[%s11 + $0x8] sm:$0xf]
        %v556 = vld [vmem:[%s11 + $0xc] sm:$0xf]
        %v557 = vld [vmem:[%s12] sm:$0x3]
        %v558 = vld [vmem:[%s13] sm:$0xf]
        %v559 = vld [vmem:[%s13 + $0x4] sm:$0xf]
        %v560 = vld [vmem:[%s13 + $0x8] sm:$0xf]
        %v561 = vld [vmem:[%s13 + $0xc] sm:$0xf]
        %v562 = vld [vmem:[%s13 + $0x10] sm:$0xf]
        %v563 = vld [vmem:[%s13 + $0x14] sm:$0xf]
        %v564 = vld [vmem:[%s13 + $0x18] sm:$0xf]
        %v565 = vld [vmem:[%s13 + $0x1c] sm:$0xf]
        %v566 = vld [vmem:[%s14] sm:$0xf]
        %v567 = vlaneseq
        %v568 = vshrl.u32 %v567, 7
        %v569 = vlaneseq
        %v570 = vand.u32 %v569, 127
        %vm571 = vcmp.ge.s32.totalorder %v568, %v570
        %v572 = vsub.s32 %v568, %v570
        %vm573 = vcmp.lt.s32.totalorder %v572, 4
        %vm574 = vmand %vm571, %vm573
        %v575 = vsel %vm574, 1, 0
        %v576 = vcvt.s32.f32 %v575
        %v577 = vpack.c.bf16 %v576, %v576
        %v578 = vsub.s32 %v570, %v568
        %vm579 = vcmp.gt.s32.totalorder %v578, 4
        %v580 = vsel %vm579, 1, 0
        %v581 = vcvt.s32.f32 %v580
        %v582 = vpack.c.bf16 %v581, %v581
        %v583 = vld [vmem:[%s5] sm:$0x1]
        %v584 = vld [vmem:[%s6] sm:$0x1]
        %vm585 = vcmask 261120
        %v586 = vsel %vm585, %v551, 0.0
        %587 = vadd.xlane.f32.xlu0 %v586
        %v588 = vpop.xlane.xlu0 %587
        %v589 = vrcp.pop 32.0
        %v590 = vmul.f32 %v588, %v589
        %v591 = vsub.f32 %v551, %v590
        %v592 = vmul.f32 %v591, %v591
        %v593 = vsel %vm585, %v592, 0.0
        %594 = vadd.xlane.f32.xlu0 %v593
        %v595 = vpop.xlane.xlu0 %594
        %v596 = vmul.f32 %v595, %v589
        %v597 = vadd.f32 %v596, 1e-05
        %v598 = vrsqrt.pop %v597
        %v599 = vmul.f32 %v591, %v598
        %v601 = vlaneseq
        %v602 = vshrl.u32 %v601, 7
        %v603 = vsub.s32 0, %v602
        %v604 = vrot.slane %v583, %v603
        %v606 = vmul.f32 %v599, %v604
        %v608 = vlaneseq
        %v609 = vshrl.u32 %v608, 7
        %v610 = vsub.s32 0, %v609
        %v611 = vrot.slane %v584, %v610
        %v613 = vadd.f32 %v606, %v611
        %v614 = vpack.c.bf16 %v613, %v613
        %v615 = vld [vmem:[%s2] sm:$0xf]
        %v616 = vld [vmem:[%s2 + $0x4] sm:$0xf]
        %v617 = vld [vmem:[%s2 + $0x8] sm:$0xf]
        %v618 = vld [vmem:[%s2 + $0xc] sm:$0xf]
        %v623 = vunpack.c.l.b16 %v615
        %v624 = vunpack.c.l.b16 %v616
        %v625 = vunpack.c.l.b16 %v617
        %v626 = vunpack.c.l.b16 %v618
        %v627 = vpack.c.b16 %v624, %v623
        %v628 = vpack.c.b16 %v626, %v625
        %v632 = vsel %vm585, %v614, 0
        %634 = vmatprep.subr.bf16.mxu0 0
        %635 = vmatpush1.bf16.msra.mxu0 0
        %636 = vmatprep.subr.bf16.mxu0 0
        %637 = vmatpush1.bf16.msra.mxu0 0
        %638 = vmatprep.subr.bf16.mxu0 0
        %639 = vmatpush1.bf16.msra.mxu0 0
        %640 = vmatprep.subr.bf16.mxu0 0
        %641 = vmatpush1.bf16.msra.mxu0 0
        %642 = vmatprep.subr.bf16.mxu0 0
        %643 = vmatpush1.bf16.msra.mxu0 0
        %644 = vmatprep.subr.bf16.mxu0 0
        %645 = vmatpush1.bf16.msra.mxu0 0
        %646 = vmatprep.subr.bf16.mxu0 0
        %647 = vmatpush1.bf16.msra.mxu0 %v628
        %648 = vmatprep.subr.bf16.mxu0 0
        %649 = vmatpush1.bf16.msra.mxu0 %v627
        %650 = vmatprep.subr.bf16.mxu0 0
        %651 = vmatpush2.bf16.msra.mxu0 0
        %652 = vmatprep.subr.bf16.mxu0 0
        %653 = vmatpush2.bf16.msra.mxu0 0
        %654 = vmatprep.subr.bf16.mxu0 0
        %655 = vmatpush2.bf16.msra.mxu0 0
        %656 = vmatprep.subr.bf16.mxu0 0
        %657 = vmatpush2.bf16.msra.mxu0 0
        %658 = vmatprep.subr.bf16.mxu0 0
        %659 = vmatpush2.bf16.msra.mxu0 0
        %660 = vmatprep.subr.bf16.mxu0 0
        %661 = vmatpush2.bf16.msra.mxu0 0
        %662 = vmatprep.subr.bf16.mxu0 0
        %663 = vmatpush2.bf16.msra.mxu0 0
        %664 = vmatprep.subr.bf16.mxu0 0
        %665 = vmatpush2.bf16.msra.mxu0 0
        %666 = vmatprep.mubr.bf16.mxu0 0
        %667 = vmatmul.mubr.bf16.gmra.mxu0 %v632
        %v668 = vpop.f32.mrf.mxu0
        %v669 = vadd.f32 0.0, %v668
        %v670 = vpop.f32.mrf.mxu0
        %v671 = vpop.f32.mrf.mxu0
        %v672 = vpop.f32.mrf.mxu0
        %673 = vdwg.mxu0
        %v674 = vld [vmem:[%s3] sm:$0x1]
        %v675 = vpack.c.bf16 %v669, %v669
        %v676 = vmul.f32 %v669, %v669
        %v677 = vpack.c.bf16 %v676, %v676
        %679 = vrot.lane.b32.xlu0 %v677, 32
        %v680 = vpop.permute.xlu0 %679
        %v683 = vsel %vm585, %v675, %v680
        %v692 = vunpack.c.l.b16 %v558
        %v693 = vunpack.c.l.b16 %v559
        %v694 = vunpack.c.l.b16 %v560
        %v695 = vunpack.c.l.b16 %v561
        %v696 = vunpack.c.l.b16 %v562
        %v697 = vunpack.c.l.b16 %v563
        %v698 = vunpack.c.l.b16 %v564
        %v699 = vunpack.c.l.b16 %v565
        %v700 = vpack.c.b16 %v693, %v692
        %v701 = vpack.c.b16 %v695, %v694
        %v702 = vpack.c.b16 %v697, %v696
        %v703 = vpack.c.b16 %v699, %v698
        %vm708 = vcmask 523264
        %v709 = vsel %vm708, %v683, 0
        %711 = vmatprep.subr.bf16.mxu0 0
        %712 = vmatpush1.bf16.msra.mxu0 0
        %713 = vmatprep.subr.bf16.mxu0 0
        %714 = vmatpush1.bf16.msra.mxu0 0
        %715 = vmatprep.subr.bf16.mxu0 0
        %716 = vmatpush1.bf16.msra.mxu0 0
        %717 = vmatprep.subr.bf16.mxu0 0
        %718 = vmatpush1.bf16.msra.mxu0 0
        %719 = vmatprep.subr.bf16.mxu0 0
        %720 = vmatpush1.bf16.msra.mxu0 %v703
        %721 = vmatprep.subr.bf16.mxu0 0
        %722 = vmatpush1.bf16.msra.mxu0 %v702
        %723 = vmatprep.subr.bf16.mxu0 0
        %724 = vmatpush1.bf16.msra.mxu0 %v701
        %725 = vmatprep.subr.bf16.mxu0 0
        %726 = vmatpush1.bf16.msra.mxu0 %v700
        %727 = vmatprep.subr.bf16.mxu0 0
        %728 = vmatpush2.bf16.msra.mxu0 0
        %729 = vmatprep.subr.bf16.mxu0 0
        %730 = vmatpush2.bf16.msra.mxu0 0
        %731 = vmatprep.subr.bf16.mxu0 0
        %732 = vmatpush2.bf16.msra.mxu0 0
        %733 = vmatprep.subr.bf16.mxu0 0
        %734 = vmatpush2.bf16.msra.mxu0 0
        %735 = vmatprep.subr.bf16.mxu0 0
        %736 = vmatpush2.bf16.msra.mxu0 0
        %737 = vmatprep.subr.bf16.mxu0 0
        %738 = vmatpush2.bf16.msra.mxu0 0
        %739 = vmatprep.subr.bf16.mxu0 0
        %740 = vmatpush2.bf16.msra.mxu0 0
        %741 = vmatprep.subr.bf16.mxu0 0
        %742 = vmatpush2.bf16.msra.mxu0 0
        %743 = vmatprep.mubr.bf16.mxu0 0
        %744 = vmatmul.mubr.bf16.gmra.mxu0 %v709
        %v745 = vpop.f32.mrf.mxu0
        %v746 = vadd.f32 0.0, %v745
        %v747 = vpop.f32.mrf.mxu0
        %v748 = vpop.f32.mrf.mxu0
        %v749 = vpop.f32.mrf.mxu0
        %750 = vdwg.mxu0
        %v751 = vmul.f32 %v746, 0.125
        %v752 = vmul.f32 %v751, %v751
        %754 = vrot.lane.b32.xlu0 %v752, 4
        %v755 = vpop.permute.xlu0 %754
        %v757 = vsub.f32 %v751, %v755
        %v758 = vmul.f32 %v757, 1.1428572
        %v759 = vmax.f32 %v758, 0.0
        %v760 = vrsqrt.pop %v759
        %v761 = vmul.f32 %v759, %v760
        %vm762 = vcmp.eq.f32.partialorder %v759, inf
        %v763 = vsel %vm762, %v759, %v761
        %vm764 = vcmp.eq.f32.partialorder %v759, 0.0
        %v765 = vand.u32 %v759, 2147483648
        %v766 = vsel %vm764, %v765, %v763
        %v767 = vadd.f32 %v766, 1e-05
        %v768 = vrcp.pop %v767
        %vm769 = vcmask 31744
        %v770 = vsel %vm769, %v751, %v768
        %v771 = vpack.c.bf16 %v770, %v770
        %vm772 = vcmask 64512
        %v774 = vsel %vm772, %v771, 0
        %vm776 = vcmask 1043456
        %v778 = vsel %vm776, %v566, 0
        %780 = vmatprep.subr.bf16.mxu0 0
        %781 = vmatpush1.bf16.msra.mxu0 0
        %782 = vmatprep.subr.bf16.mxu0 0
        %783 = vmatpush1.bf16.msra.mxu0 0
        %784 = vmatprep.subr.bf16.mxu0 0
        %785 = vmatpush1.bf16.msra.mxu0 0
        %786 = vmatprep.subr.bf16.mxu0 0
        %787 = vmatpush1.bf16.msra.mxu0 0
        %788 = vmatprep.subr.bf16.mxu0 0
        %789 = vmatpush1.bf16.msra.mxu0 0
        %790 = vmatprep.subr.bf16.mxu0 0
        %791 = vmatpush1.bf16.msra.mxu0 0
        %792 = vmatprep.subr.bf16.mxu0 0
        %793 = vmatpush1.bf16.msra.mxu0 0
        %794 = vmatprep.subr.bf16.mxu0 0
        %795 = vmatpush1.bf16.msra.mxu0 %v778
        %796 = vmatprep.subr.bf16.mxu0 0
        %797 = vmatpush2.bf16.msra.mxu0 0
        %798 = vmatprep.subr.bf16.mxu0 0
        %799 = vmatpush2.bf16.msra.mxu0 0
        %800 = vmatprep.subr.bf16.mxu0 0
        %801 = vmatpush2.bf16.msra.mxu0 0
        %802 = vmatprep.subr.bf16.mxu0 0
        %803 = vmatpush2.bf16.msra.mxu0 0
        %804 = vmatprep.subr.bf16.mxu0 0
        %805 = vmatpush2.bf16.msra.mxu0 0
        %806 = vmatprep.subr.bf16.mxu0 0
        %807 = vmatpush2.bf16.msra.mxu0 0
        %808 = vmatprep.subr.bf16.mxu0 0
        %809 = vmatpush2.bf16.msra.mxu0 0
        %810 = vmatprep.subr.bf16.mxu0 0
        %811 = vmatpush2.bf16.msra.mxu0 0
        %812 = vmatprep.mubr.bf16.mxu0 0
        %813 = vmatmul.mubr.bf16.gmra.mxu0 %v774
        %v814 = vpop.f32.mrf.mxu0
        %v815 = vadd.f32 0.0, %v814
        %v816 = vpop.f32.mrf.mxu0
        %v817 = vpop.f32.mrf.mxu0
        %v818 = vpop.f32.mrf.mxu0
        %819 = vdwg.mxu0
        %v820 = vsub.f32 %v669, %v815
        %822 = vrot.lane.b32.xlu0 %v815, 96
        %v823 = vpop.permute.xlu0 %822
        %v825 = vmul.f32 %v820, %v823
        %v827 = vlaneseq
        %v828 = vshrl.u32 %v827, 7
        %v829 = vsub.s32 0, %v828
        %v830 = vrot.slane %v674, %v829
        %v832 = vmul.f32 %v825, %v830
        %v833 = vpack.c.bf16 %v832, %v832
        %835 = vset.pattern.permute.xlu0 0
        %836 = vperm.xlu0 %835, %v552
        %v837 = vpop.permute.xlu0 %836
        %v843 = vunpack.c.l.b16 %v553
        %v844 = vunpack.c.l.b16 %v554
        %v845 = vunpack.c.l.b16 %v555
        %v846 = vunpack.c.l.b16 %v556
        %v847 = vpack.c.b16 %v844, %v843
        %v848 = vpack.c.b16 %v846, %v845
        %v852 = vsel %vm585, %v833, 0
        %854 = vmatprep.subr.bf16.mxu0 0
        %855 = vmatpush1.bf16.msra.mxu0 0
        %856 = vmatprep.subr.bf16.mxu0 0
        %857 = vmatpush1.bf16.msra.mxu0 0
        %858 = vmatprep.subr.bf16.mxu0 0
        %859 = vmatpush1.bf16.msra.mxu0 0
        %860 = vmatprep.subr.bf16.mxu0 0
        %861 = vmatpush1.bf16.msra.mxu0 0
        %862 = vmatprep.subr.bf16.mxu0 0
        %863 = vmatpush1.bf16.msra.mxu0 0
        %864 = vmatprep.subr.bf16.mxu0 0
        %865 = vmatpush1.bf16.msra.mxu0 0
        %866 = vmatprep.subr.bf16.mxu0 0
        %867 = vmatpush1.bf16.msra.mxu0 %v848
        %868 = vmatprep.subr.bf16.mxu0 0
        %869 = vmatpush1.bf16.msra.mxu0 %v847
        %870 = vmatprep.subr.bf16.mxu0 0
        %871 = vmatpush2.bf16.msra.mxu0 0
        %872 = vmatprep.subr.bf16.mxu0 0
        %873 = vmatpush2.bf16.msra.mxu0 0
        %874 = vmatprep.subr.bf16.mxu0 0
        %875 = vmatpush2.bf16.msra.mxu0 0
        %876 = vmatprep.subr.bf16.mxu0 0
        %877 = vmatpush2.bf16.msra.mxu0 0
        %878 = vmatprep.subr.bf16.mxu0 0
        %879 = vmatpush2.bf16.msra.mxu0 0
        %880 = vmatprep.subr.bf16.mxu0 0
        %881 = vmatpush2.bf16.msra.mxu0 0
        %882 = vmatprep.subr.bf16.mxu0 0
        %883 = vmatpush2.bf16.msra.mxu0 0
        %884 = vmatprep.subr.bf16.mxu0 0
        %885 = vmatpush2.bf16.msra.mxu0 0
        %886 = vmatprep.mubr.bf16.mxu0 0
        %887 = vmatmul.mubr.bf16.gmra.mxu0 %v852
        %v888 = vpop.f32.mrf.mxu0
        %v889 = vadd.f32 %v837, %v888
        %v890 = vpop.f32.mrf.mxu0
        %v891 = vpop.f32.mrf.mxu0
        %v892 = vpop.f32.mrf.mxu0
        %893 = vdwg.mxu0
        %v894 = vmul.f32 %v889, 1.442695
        %v895 = vpow.pop %v894
        %v896 = vpack.c.bf16 %v895, %v895
        %v898 = vsel %vm769, %v896, 0
        %vm900 = vcmask 1041408
        %v902 = vsel %vm900, %v557, 0
        %904 = vmatprep.subr.bf16.mxu0 0
        %905 = vmatpush1.bf16.msra.mxu0 0
        %906 = vmatprep.subr.bf16.mxu0 0
        %907 = vmatpush1.bf16.msra.mxu0 0
        %908 = vmatprep.subr.bf16.mxu0 0
        %909 = vmatpush1.bf16.msra.mxu0 0
        %910 = vmatprep.subr.bf16.mxu0 0
        %911 = vmatpush1.bf16.msra.mxu0 0
        %912 = vmatprep.subr.bf16.mxu0 0
        %913 = vmatpush1.bf16.msra.mxu0 0
        %914 = vmatprep.subr.bf16.mxu0 0
        %915 = vmatpush1.bf16.msra.mxu0 0
        %916 = vmatprep.subr.bf16.mxu0 0
        %917 = vmatpush1.bf16.msra.mxu0 0
        %918 = vmatprep.subr.bf16.mxu0 0
        %919 = vmatpush1.bf16.msra.mxu0 %v902
        %920 = vmatprep.subr.bf16.mxu0 0
        %921 = vmatpush2.bf16.msra.mxu0 0
        %922 = vmatprep.subr.bf16.mxu0 0
        %923 = vmatpush2.bf16.msra.mxu0 0
        %924 = vmatprep.subr.bf16.mxu0 0
        %925 = vmatpush2.bf16.msra.mxu0 0
        %926 = vmatprep.subr.bf16.mxu0 0
        %927 = vmatpush2.bf16.msra.mxu0 0
        %928 = vmatprep.subr.bf16.mxu0 0
        %929 = vmatpush2.bf16.msra.mxu0 0
        %930 = vmatprep.subr.bf16.mxu0 0
        %931 = vmatpush2.bf16.msra.mxu0 0
        %932 = vmatprep.subr.bf16.mxu0 0
        %933 = vmatpush2.bf16.msra.mxu0 0
        %934 = vmatprep.subr.bf16.mxu0 0
        %935 = vmatpush2.bf16.msra.mxu0 0
        %936 = vmatprep.mubr.bf16.mxu0 0
        %937 = vmatmul.mubr.bf16.gmra.mxu0 %v898
        %v938 = vpop.f32.mrf.mxu0
        %v939 = vadd.f32 0.0, %v938
        %v940 = vpop.f32.mrf.mxu0
        %v941 = vpop.f32.mrf.mxu0
        %v942 = vpop.f32.mrf.mxu0
        %943 = vdwg.mxu0
        %v944 = vmul.f32 %v939, %v825
        %v945 = vpack.c.bf16 %v944, %v944
        %947 = vrot.lane.b32.xlu0 %v896, 32
        %v948 = vpop.permute.xlu0 %947
        %v951 = vsel %vm585, %v945, %v948
        %v953 = vld [vmem:[#allocation2] sm:$0xf]
        %v955 = vsel %vm772, %v582, 0
        %v958 = vsel %vm776, %v953, 0
        %960 = vmatprep.subr.bf16.mxu0 0
        %961 = vmatpush1.bf16.msra.mxu0 0
        %962 = vmatprep.subr.bf16.mxu0 0
        %963 = vmatpush1.bf16.msra.mxu0 0
        %964 = vmatprep.subr.bf16.mxu0 0
        %965 = vmatpush1.bf16.msra.mxu0 0
        %966 = vmatprep.subr.bf16.mxu0 0
        %967 = vmatpush1.bf16.msra.mxu0 0
        %968 = vmatprep.subr.bf16.mxu0 0
        %969 = vmatpush1.bf16.msra.mxu0 0
        %970 = vmatprep.subr.bf16.mxu0 0
        %971 = vmatpush1.bf16.msra.mxu0 0
        %972 = vmatprep.subr.bf16.mxu0 0
        %973 = vmatpush1.bf16.msra.mxu0 0
        %974 = vmatprep.subr.bf16.mxu0 0
        %975 = vmatpush1.bf16.msra.mxu0 %v958
        %976 = vmatprep.subr.bf16.mxu0 0
        %977 = vmatpush2.bf16.msra.mxu0 0
        %978 = vmatprep.subr.bf16.mxu0 0
        %979 = vmatpush2.bf16.msra.mxu0 0
        %980 = vmatprep.subr.bf16.mxu0 0
        %981 = vmatpush2.bf16.msra.mxu0 0
        %982 = vmatprep.subr.bf16.mxu0 0
        %983 = vmatpush2.bf16.msra.mxu0 0
        %984 = vmatprep.subr.bf16.mxu0 0
        %985 = vmatpush2.bf16.msra.mxu0 0
        %986 = vmatprep.subr.bf16.mxu0 0
        %987 = vmatpush2.bf16.msra.mxu0 0
        %988 = vmatprep.subr.bf16.mxu0 0
        %989 = vmatpush2.bf16.msra.mxu0 0
        %990 = vmatprep.subr.bf16.mxu0 0
        %991 = vmatpush2.bf16.msra.mxu0 0
        %992 = vmatprep.mubr.bf16.mxu0 0
        %993 = vmatmul.mubr.bf16.gmra.mxu0 %v955
        %v994 = vpop.f32.mrf.mxu0
        %v995 = vadd.f32 0.0, %v994
        %v996 = vpop.f32.mrf.mxu0
        %v997 = vpop.f32.mrf.mxu0
        %v998 = vpop.f32.mrf.mxu0
        %999 = vdwg.mxu0
        %v1001 = vsel %vm772, %v577, 0
        %v1003 = vsel %vm776, %v951, 0
        %1005 = vmatprep.subr.bf16.mxu0 0
        %1006 = vmatpush1.bf16.msra.mxu0 0
        %1007 = vmatprep.subr.bf16.mxu0 0
        %1008 = vmatpush1.bf16.msra.mxu0 0
        %1009 = vmatprep.subr.bf16.mxu0 0
        %1010 = vmatpush1.bf16.msra.mxu0 0
        %1011 = vmatprep.subr.bf16.mxu0 0
        %1012 = vmatpush1.bf16.msra.mxu0 0
        %1013 = vmatprep.subr.bf16.mxu0 0
        %1014 = vmatpush1.bf16.msra.mxu0 0
        %1015 = vmatprep.subr.bf16.mxu0 0
        %1016 = vmatpush1.bf16.msra.mxu0 0
        %1017 = vmatprep.subr.bf16.mxu0 0
        %1018 = vmatpush1.bf16.msra.mxu0 0
        %1019 = vmatprep.subr.bf16.mxu0 0
        %1020 = vmatpush1.bf16.msra.mxu0 %v1003
        %1021 = vmatprep.subr.bf16.mxu0 0
        %1022 = vmatpush2.bf16.msra.mxu0 0
        %1023 = vmatprep.subr.bf16.mxu0 0
        %1024 = vmatpush2.bf16.msra.mxu0 0
        %1025 = vmatprep.subr.bf16.mxu0 0
        %1026 = vmatpush2.bf16.msra.mxu0 0
        %1027 = vmatprep.subr.bf16.mxu0 0
        %1028 = vmatpush2.bf16.msra.mxu0 0
        %1029 = vmatprep.subr.bf16.mxu0 0
        %1030 = vmatpush2.bf16.msra.mxu0 0
        %1031 = vmatprep.subr.bf16.mxu0 0
        %1032 = vmatpush2.bf16.msra.mxu0 0
        %1033 = vmatprep.subr.bf16.mxu0 0
        %1034 = vmatpush2.bf16.msra.mxu0 0
        %1035 = vmatprep.subr.bf16.mxu0 0
        %1036 = vmatpush2.bf16.msra.mxu0 0
        %1037 = vmatprep.mubr.bf16.mxu0 0
        %1038 = vmatmul.mubr.bf16.gmra.mxu0 %v1001
        %v1039 = vpop.f32.mrf.mxu0
        %v1040 = vadd.f32 %v995, %v1039
        %v1041 = vpop.f32.mrf.mxu0
        %v1042 = vpop.f32.mrf.mxu0
        %v1043 = vpop.f32.mrf.mxu0
        %1044 = vdwg.mxu0
        %vm1045 = vcmask 289792
        %1046 = vst.msk [vmem:[#allocation2] sm:$0xf] %vm1045, %v951
        %v1047 = vadd.f32 %v1040, 1e-05
        %v1048 = vrcp.pop %v1047
        %v1049 = vpack.c.bf16 %v1048, %v1048
        %1051 = vrot.lane.b32.xlu0 %v1049, 96
        %v1052 = vpop.permute.xlu0 %1051
        %v1054 = vsel %vm769, %v1052, 0
        %1056 = vmatprep.subr.bf16.mxu0 0
        %1057 = vmatpush1.bf16.msra.mxu0 0
        %1058 = vmatprep.subr.bf16.mxu0 0
        %1059 = vmatpush1.bf16.msra.mxu0 0
        %1060 = vmatprep.subr.bf16.mxu0 0
        %1061 = vmatpush1.bf16.msra.mxu0 0
        %1062 = vmatprep.subr.bf16.mxu0 0
        %1063 = vmatpush1.bf16.msra.mxu0 0
        %1064 = vmatprep.subr.bf16.mxu0 0
        %1065 = vmatpush1.bf16.msra.mxu0 0
        %1066 = vmatprep.subr.bf16.mxu0 0
        %1067 = vmatpush1.bf16.msra.mxu0 0
        %1068 = vmatprep.subr.bf16.mxu0 0
        %1069 = vmatpush1.bf16.msra.mxu0 0
        %1070 = vmatprep.subr.bf16.mxu0 0
        %1071 = vmatpush1.bf16.msra.mxu0 %v902
        %1072 = vmatprep.subr.bf16.mxu0 0
        %1073 = vmatpush2.bf16.msra.mxu0 0
        %1074 = vmatprep.subr.bf16.mxu0 0
        %1075 = vmatpush2.bf16.msra.mxu0 0
        %1076 = vmatprep.subr.bf16.mxu0 0
        %1077 = vmatpush2.bf16.msra.mxu0 0
        %1078 = vmatprep.subr.bf16.mxu0 0
        %1079 = vmatpush2.bf16.msra.mxu0 0
        %1080 = vmatprep.subr.bf16.mxu0 0
        %1081 = vmatpush2.bf16.msra.mxu0 0
        %1082 = vmatprep.subr.bf16.mxu0 0
        %1083 = vmatpush2.bf16.msra.mxu0 0
        %1084 = vmatprep.subr.bf16.mxu0 0
        %1085 = vmatpush2.bf16.msra.mxu0 0
        %1086 = vmatprep.subr.bf16.mxu0 0
        %1087 = vmatpush2.bf16.msra.mxu0 0
        %1088 = vmatprep.mubr.bf16.mxu0 0
        %1089 = vmatmul.mubr.bf16.gmra.mxu0 %v1054
        %v1090 = vpop.f32.mrf.mxu0
        %v1091 = vadd.f32 0.0, %v1090
        %v1092 = vpop.f32.mrf.mxu0
        %v1093 = vpop.f32.mrf.mxu0
        %v1094 = vpop.f32.mrf.mxu0
        %1095 = vdwg.mxu0
        %v1096 = vmul.f32 %v1040, %v1091
        %1098 = vrot.lane.b32.xlu0 %v669, 96
        %v1099 = vpop.permute.xlu0 %1098
        %v1101 = vmul.f32 %v1096, %v1099
        %v1102 = vld [vmem:[%s4] sm:$0x1]
        %v1103 = vpack.c.bf16 %v1101, %v1101
        %v1104 = vmul.f32 %v1101, %v1101
        %v1105 = vpack.c.bf16 %v1104, %v1104
        %1107 = vrot.lane.b32.xlu0 %v1105, 32
        %v1108 = vpop.permute.xlu0 %1107
        %v1111 = vsel %vm585, %v1103, %v1108
        %v1112 = vsel %vm708, %v1111, 0
        %1114 = vmatprep.subr.bf16.mxu0 0
        %1115 = vmatpush1.bf16.msra.mxu0 0
        %1116 = vmatprep.subr.bf16.mxu0 0
        %1117 = vmatpush1.bf16.msra.mxu0 0
        %1118 = vmatprep.subr.bf16.mxu0 0
        %1119 = vmatpush1.bf16.msra.mxu0 0
        %1120 = vmatprep.subr.bf16.mxu0 0
        %1121 = vmatpush1.bf16.msra.mxu0 0
        %1122 = vmatprep.subr.bf16.mxu0 0
        %1123 = vmatpush1.bf16.msra.mxu0 %v703
        %1124 = vmatprep.subr.bf16.mxu0 0
        %1125 = vmatpush1.bf16.msra.mxu0 %v702
        %1126 = vmatprep.subr.bf16.mxu0 0
        %1127 = vmatpush1.bf16.msra.mxu0 %v701
        %1128 = vmatprep.subr.bf16.mxu0 0
        %1129 = vmatpush1.bf16.msra.mxu0 %v700
        %1130 = vmatprep.subr.bf16.mxu0 0
        %1131 = vmatpush2.bf16.msra.mxu0 0
        %1132 = vmatprep.subr.bf16.mxu0 0
        %1133 = vmatpush2.bf16.msra.mxu0 0
        %1134 = vmatprep.subr.bf16.mxu0 0
        %1135 = vmatpush2.bf16.msra.mxu0 0
        %1136 = vmatprep.subr.bf16.mxu0 0
        %1137 = vmatpush2.bf16.msra.mxu0 0
        %1138 = vmatprep.subr.bf16.mxu0 0
        %1139 = vmatpush2.bf16.msra.mxu0 0
        %1140 = vmatprep.subr.bf16.mxu0 0
        %1141 = vmatpush2.bf16.msra.mxu0 0
        %1142 = vmatprep.subr.bf16.mxu0 0
        %1143 = vmatpush2.bf16.msra.mxu0 0
        %1144 = vmatprep.subr.bf16.mxu0 0
        %1145 = vmatpush2.bf16.msra.mxu0 0
        %1146 = vmatprep.mubr.bf16.mxu0 0
        %1147 = vmatmul.mubr.bf16.gmra.mxu0 %v1112
        %v1148 = vpop.f32.mrf.mxu0
        %v1149 = vadd.f32 0.0, %v1148
        %v1150 = vpop.f32.mrf.mxu0
        %v1151 = vpop.f32.mrf.mxu0
        %v1152 = vpop.f32.mrf.mxu0
        %1153 = vdwg.mxu0
        %v1154 = vmul.f32 %v1149, 0.125
        %v1155 = vmul.f32 %v1154, %v1154
        %1157 = vrot.lane.b32.xlu0 %v1155, 4
        %v1158 = vpop.permute.xlu0 %1157
        %v1160 = vsub.f32 %v1154, %v1158
        %v1161 = vmul.f32 %v1160, 1.1428572
        %v1162 = vmax.f32 %v1161, 0.0
        %v1163 = vrsqrt.pop %v1162
        %v1164 = vmul.f32 %v1162, %v1163
        %vm1165 = vcmp.eq.f32.partialorder %v1162, inf
        %v1166 = vsel %vm1165, %v1162, %v1164
        %vm1167 = vcmp.eq.f32.partialorder %v1162, 0.0
        %v1168 = vand.u32 %v1162, 2147483648
        %v1169 = vsel %vm1167, %v1168, %v1166
        %v1170 = vadd.f32 %v1169, 1e-05
        %v1171 = vrcp.pop %v1170
        %v1172 = vsel %vm769, %v1154, %v1171
        %v1173 = vpack.c.bf16 %v1172, %v1172
        %v1175 = vsel %vm772, %v1173, 0
        %1177 = vmatprep.subr.bf16.mxu0 0
        %1178 = vmatpush1.bf16.msra.mxu0 0
        %1179 = vmatprep.subr.bf16.mxu0 0
        %1180 = vmatpush1.bf16.msra.mxu0 0
        %1181 = vmatprep.subr.bf16.mxu0 0
        %1182 = vmatpush1.bf16.msra.mxu0 0
        %1183 = vmatprep.subr.bf16.mxu0 0
        %1184 = vmatpush1.bf16.msra.mxu0 0
        %1185 = vmatprep.subr.bf16.mxu0 0
        %1186 = vmatpush1.bf16.msra.mxu0 0
        %1187 = vmatprep.subr.bf16.mxu0 0
        %1188 = vmatpush1.bf16.msra.mxu0 0
        %1189 = vmatprep.subr.bf16.mxu0 0
        %1190 = vmatpush1.bf16.msra.mxu0 0
        %1191 = vmatprep.subr.bf16.mxu0 0
        %1192 = vmatpush1.bf16.msra.mxu0 %v778
        %1193 = vmatprep.subr.bf16.mxu0 0
        %1194 = vmatpush2.bf16.msra.mxu0 0
        %1195 = vmatprep.subr.bf16.mxu0 0
        %1196 = vmatpush2.bf16.msra.mxu0 0
        %1197 = vmatprep.subr.bf16.mxu0 0
        %1198 = vmatpush2.bf16.msra.mxu0 0
        %1199 = vmatprep.subr.bf16.mxu0 0
        %1200 = vmatpush2.bf16.msra.mxu0 0
        %1201 = vmatprep.subr.bf16.mxu0 0
        %1202 = vmatpush2.bf16.msra.mxu0 0
        %1203 = vmatprep.subr.bf16.mxu0 0
        %1204 = vmatpush2.bf16.msra.mxu0 0
        %1205 = vmatprep.subr.bf16.mxu0 0
        %1206 = vmatpush2.bf16.msra.mxu0 0
        %1207 = vmatprep.subr.bf16.mxu0 0
        %1208 = vmatpush2.bf16.msra.mxu0 0
        %1209 = vmatprep.mubr.bf16.mxu0 0
        %1210 = vmatmul.mubr.bf16.gmra.mxu0 %v1175
        %v1211 = vpop.f32.mrf.mxu0
        %v1212 = vadd.f32 0.0, %v1211
        %v1213 = vpop.f32.mrf.mxu0
        %v1214 = vpop.f32.mrf.mxu0
        %v1215 = vpop.f32.mrf.mxu0
        %1216 = vdwg.mxu0
        %v1217 = vsub.f32 %v1101, %v1212
        %1219 = vrot.lane.b32.xlu0 %v1212, 96
        %v1220 = vpop.permute.xlu0 %1219
        %v1222 = vmul.f32 %v1217, %v1220
        %v1224 = vlaneseq
        %v1225 = vshrl.u32 %v1224, 7
        %v1226 = vsub.s32 0, %v1225
        %v1227 = vrot.slane %v1102, %v1226
        %v1229 = vmul.f32 %v1222, %v1227
        %v1230 = vpack.c.bf16 %v1229, %v1229
        %v1232 = vsel %vm585, %v1230, 0
        %1234 = vmatprep.subr.bf16.mxu0 0
        %1235 = vmatpush1.bf16.msra.mxu0 0
        %1236 = vmatprep.subr.bf16.mxu0 0
        %1237 = vmatpush1.bf16.msra.mxu0 0
        %1238 = vmatprep.subr.bf16.mxu0 0
        %1239 = vmatpush1.bf16.msra.mxu0 0
        %1240 = vmatprep.subr.bf16.mxu0 0
        %1241 = vmatpush1.bf16.msra.mxu0 0
        %1242 = vmatprep.subr.bf16.mxu0 0
        %1243 = vmatpush1.bf16.msra.mxu0 0
        %1244 = vmatprep.subr.bf16.mxu0 0
        %1245 = vmatpush1.bf16.msra.mxu0 0
        %1246 = vmatprep.subr.bf16.mxu0 0
        %1247 = vmatpush1.bf16.msra.mxu0 %v848
        %1248 = vmatprep.subr.bf16.mxu0 0
        %1249 = vmatpush1.bf16.msra.mxu0 %v847
        %1250 = vmatprep.subr.bf16.mxu0 0
        %1251 = vmatpush2.bf16.msra.mxu0 0
        %1252 = vmatprep.subr.bf16.mxu0 0
        %1253 = vmatpush2.bf16.msra.mxu0 0
        %1254 = vmatprep.subr.bf16.mxu0 0
        %1255 = vmatpush2.bf16.msra.mxu0 0
        %1256 = vmatprep.subr.bf16.mxu0 0
        %1257 = vmatpush2.bf16.msra.mxu0 0
        %1258 = vmatprep.subr.bf16.mxu0 0
        %1259 = vmatpush2.bf16.msra.mxu0 0
        %1260 = vmatprep.subr.bf16.mxu0 0
        %1261 = vmatpush2.bf16.msra.mxu0 0
        %1262 = vmatprep.subr.bf16.mxu0 0
        %1263 = vmatpush2.bf16.msra.mxu0 0
        %1264 = vmatprep.subr.bf16.mxu0 0
        %1265 = vmatpush2.bf16.msra.mxu0 0
        %1266 = vmatprep.mubr.bf16.mxu0 0
        %1267 = vmatmul.mubr.bf16.gmra.mxu0 %v1232
        %v1268 = vpop.f32.mrf.mxu0
        %v1269 = vadd.f32 %v837, %v1268
        %v1270 = vpop.f32.mrf.mxu0
        %v1271 = vpop.f32.mrf.mxu0
        %v1272 = vpop.f32.mrf.mxu0
        %1273 = vdwg.mxu0
        %v1274 = vmul.f32 %v1269, 1.442695
        %v1275 = vpow.pop %v1274
        %v1276 = vpack.c.bf16 %v1275, %v1275
        %v1278 = vsel %vm769, %v1276, 0
        %1280 = vmatprep.subr.bf16.mxu0 0
        %1281 = vmatpush1.bf16.msra.mxu0 0
        %1282 = vmatprep.subr.bf16.mxu0 0
        %1283 = vmatpush1.bf16.msra.mxu0 0
        %1284 = vmatprep.subr.bf16.mxu0 0
        %1285 = vmatpush1.bf16.msra.mxu0 0
        %1286 = vmatprep.subr.bf16.mxu0 0
        %1287 = vmatpush1.bf16.msra.mxu0 0
        %1288 = vmatprep.subr.bf16.mxu0 0
        %1289 = vmatpush1.bf16.msra.mxu0 0
        %1290 = vmatprep.subr.bf16.mxu0 0
        %1291 = vmatpush1.bf16.msra.mxu0 0
        %1292 = vmatprep.subr.bf16.mxu0 0
        %1293 = vmatpush1.bf16.msra.mxu0 0
        %1294 = vmatprep.subr.bf16.mxu0 0
        %1295 = vmatpush1.bf16.msra.mxu0 %v902
        %1296 = vmatprep.subr.bf16.mxu0 0
        %1297 = vmatpush2.bf16.msra.mxu0 0
        %1298 = vmatprep.subr.bf16.mxu0 0
        %1299 = vmatpush2.bf16.msra.mxu0 0
        %1300 = vmatprep.subr.bf16.mxu0 0
        %1301 = vmatpush2.bf16.msra.mxu0 0
        %1302 = vmatprep.subr.bf16.mxu0 0
        %1303 = vmatpush2.bf16.msra.mxu0 0
        %1304 = vmatprep.subr.bf16.mxu0 0
        %1305 = vmatpush2.bf16.msra.mxu0 0
        %1306 = vmatprep.subr.bf16.mxu0 0
        %1307 = vmatpush2.bf16.msra.mxu0 0
        %1308 = vmatprep.subr.bf16.mxu0 0
        %1309 = vmatpush2.bf16.msra.mxu0 0
        %1310 = vmatprep.subr.bf16.mxu0 0
        %1311 = vmatpush2.bf16.msra.mxu0 0
        %1312 = vmatprep.mubr.bf16.mxu0 0
        %1313 = vmatmul.mubr.bf16.gmra.mxu0 %v1278
        %v1314 = vpop.f32.mrf.mxu0
        %v1315 = vadd.f32 0.0, %v1314
        %v1316 = vpop.f32.mrf.mxu0
        %v1317 = vpop.f32.mrf.mxu0
        %v1318 = vpop.f32.mrf.mxu0
        %1319 = vdwg.mxu0
        %v1320 = vmul.f32 %v1315, %v1222
        %v1321 = vpack.c.bf16 %v1320, %v1320
        %1323 = vrot.lane.b32.xlu0 %v1276, 32
        %v1324 = vpop.permute.xlu0 %1323
        %v1327 = vsel %vm585, %v1321, %v1324
        %v1329 = vld [vmem:[#allocation3] sm:$0xf]
        %v1331 = vsel %vm776, %v1329, 0
        %1333 = vmatprep.subr.bf16.mxu0 0
        %1334 = vmatpush1.bf16.msra.mxu0 0
        %1335 = vmatprep.subr.bf16.mxu0 0
        %1336 = vmatpush1.bf16.msra.mxu0 0
        %1337 = vmatprep.subr.bf16.mxu0 0
        %1338 = vmatpush1.bf16.msra.mxu0 0
        %1339 = vmatprep.subr.bf16.mxu0 0
        %1340 = vmatpush1.bf16.msra.mxu0 0
        %1341 = vmatprep.subr.bf16.mxu0 0
        %1342 = vmatpush1.bf16.msra.mxu0 0
        %1343 = vmatprep.subr.bf16.mxu0 0
        %1344 = vmatpush1.bf16.msra.mxu0 0
        %1345 = vmatprep.subr.bf16.mxu0 0
        %1346 = vmatpush1.bf16.msra.mxu0 0
        %1347 = vmatprep.subr.bf16.mxu0 0
        %1348 = vmatpush1.bf16.msra.mxu0 %v1331
        %1349 = vmatprep.subr.bf16.mxu0 0
        %1350 = vmatpush2.bf16.msra.mxu0 0
        %1351 = vmatprep.subr.bf16.mxu0 0
        %1352 = vmatpush2.bf16.msra.mxu0 0
        %1353 = vmatprep.subr.bf16.mxu0 0
        %1354 = vmatpush2.bf16.msra.mxu0 0
        %1355 = vmatprep.subr.bf16.mxu0 0
        %1356 = vmatpush2.bf16.msra.mxu0 0
        %1357 = vmatprep.subr.bf16.mxu0 0
        %1358 = vmatpush2.bf16.msra.mxu0 0
        %1359 = vmatprep.subr.bf16.mxu0 0
        %1360 = vmatpush2.bf16.msra.mxu0 0
        %1361 = vmatprep.subr.bf16.mxu0 0
        %1362 = vmatpush2.bf16.msra.mxu0 0
        %1363 = vmatprep.subr.bf16.mxu0 0
        %1364 = vmatpush2.bf16.msra.mxu0 0
        %1365 = vmatprep.mubr.bf16.mxu0 0
        %1366 = vmatmul.mubr.bf16.gmra.mxu0 %v955
        %v1367 = vpop.f32.mrf.mxu0
        %v1368 = vadd.f32 0.0, %v1367
        %v1369 = vpop.f32.mrf.mxu0
        %v1370 = vpop.f32.mrf.mxu0
        %v1371 = vpop.f32.mrf.mxu0
        %1372 = vdwg.mxu0
        %v1373 = vsel %vm776, %v1327, 0
        %1375 = vmatprep.subr.bf16.mxu0 0
        %1376 = vmatpush1.bf16.msra.mxu0 0
        %1377 = vmatprep.subr.bf16.mxu0 0
        %1378 = vmatpush1.bf16.msra.mxu0 0
        %1379 = vmatprep.subr.bf16.mxu0 0
        %1380 = vmatpush1.bf16.msra.mxu0 0
        %1381 = vmatprep.subr.bf16.mxu0 0
        %1382 = vmatpush1.bf16.msra.mxu0 0
        %1383 = vmatprep.subr.bf16.mxu0 0
        %1384 = vmatpush1.bf16.msra.mxu0 0
        %1385 = vmatprep.subr.bf16.mxu0 0
        %1386 = vmatpush1.bf16.msra.mxu0 0
        %1387 = vmatprep.subr.bf16.mxu0 0
        %1388 = vmatpush1.bf16.msra.mxu0 0
        %1389 = vmatprep.subr.bf16.mxu0 0
        %1390 = vmatpush1.bf16.msra.mxu0 %v1373
        %1391 = vmatprep.subr.bf16.mxu0 0
        %1392 = vmatpush2.bf16.msra.mxu0 0
        %1393 = vmatprep.subr.bf16.mxu0 0
        %1394 = vmatpush2.bf16.msra.mxu0 0
        %1395 = vmatprep.subr.bf16.mxu0 0
        %1396 = vmatpush2.bf16.msra.mxu0 0
        %1397 = vmatprep.subr.bf16.mxu0 0
        %1398 = vmatpush2.bf16.msra.mxu0 0
        %1399 = vmatprep.subr.bf16.mxu0 0
        %1400 = vmatpush2.bf16.msra.mxu0 0
        %1401 = vmatprep.subr.bf16.mxu0 0
        %1402 = vmatpush2.bf16.msra.mxu0 0
        %1403 = vmatprep.subr.bf16.mxu0 0
        %1404 = vmatpush2.bf16.msra.mxu0 0
        %1405 = vmatprep.subr.bf16.mxu0 0
        %1406 = vmatpush2.bf16.msra.mxu0 0
        %1407 = vmatprep.mubr.bf16.mxu0 0
        %1408 = vmatmul.mubr.bf16.gmra.mxu0 %v1001
        %v1409 = vpop.f32.mrf.mxu0
        %v1410 = vadd.f32 %v1368, %v1409
        %v1411 = vpop.f32.mrf.mxu0
        %v1412 = vpop.f32.mrf.mxu0
        %v1413 = vpop.f32.mrf.mxu0
        %1414 = vdwg.mxu0
        %1415 = vst.msk [vmem:[#allocation3] sm:$0xf] %vm1045, %v1327
        %v1416 = vadd.f32 %v1410, 1e-05
        %v1417 = vrcp.pop %v1416
        %v1418 = vpack.c.bf16 %v1417, %v1417
        %1420 = vrot.lane.b32.xlu0 %v1418, 96
        %v1421 = vpop.permute.xlu0 %1420
        %v1423 = vsel %vm769, %v1421, 0
        %1425 = vmatprep.subr.bf16.mxu0 0
        %1426 = vmatpush1.bf16.msra.mxu0 0
        %1427 = vmatprep.subr.bf16.mxu0 0
        %1428 = vmatpush1.bf16.msra.mxu0 0
        %1429 = vmatprep.subr.bf16.mxu0 0
        %1430 = vmatpush1.bf16.msra.mxu0 0
        %1431 = vmatprep.subr.bf16.mxu0 0
        %1432 = vmatpush1.bf16.msra.mxu0 0
        %1433 = vmatprep.subr.bf16.mxu0 0
        %1434 = vmatpush1.bf16.msra.mxu0 0
        %1435 = vmatprep.subr.bf16.mxu0 0
        %1436 = vmatpush1.bf16.msra.mxu0 0
        %1437 = vmatprep.subr.bf16.mxu0 0
        %1438 = vmatpush1.bf16.msra.mxu0 0
        %1439 = vmatprep.subr.bf16.mxu0 0
        %1440 = vmatpush1.bf16.msra.mxu0 %v902
        %1441 = vmatprep.subr.bf16.mxu0 0
        %1442 = vmatpush2.bf16.msra.mxu0 0
        %1443 = vmatprep.subr.bf16.mxu0 0
        %1444 = vmatpush2.bf16.msra.mxu0 0
        %1445 = vmatprep.subr.bf16.mxu0 0
        %1446 = vmatpush2.bf16.msra.mxu0 0
        %1447 = vmatprep.subr.bf16.mxu0 0
        %1448 = vmatpush2.bf16.msra.mxu0 0
        %1449 = vmatprep.subr.bf16.mxu0 0
        %1450 = vmatpush2.bf16.msra.mxu0 0
        %1451 = vmatprep.subr.bf16.mxu0 0
        %1452 = vmatpush2.bf16.msra.mxu0 0
        %1453 = vmatprep.subr.bf16.mxu0 0
        %1454 = vmatpush2.bf16.msra.mxu0 0
        %1455 = vmatprep.subr.bf16.mxu0 0
        %1456 = vmatpush2.bf16.msra.mxu0 0
        %1457 = vmatprep.mubr.bf16.mxu0 0
        %1458 = vmatmul.mubr.bf16.gmra.mxu0 %v1423
        %v1459 = vpop.f32.mrf.mxu0
        %v1460 = vadd.f32 0.0, %v1459
        %v1461 = vpop.f32.mrf.mxu0
        %v1462 = vpop.f32.mrf.mxu0
        %v1463 = vpop.f32.mrf.mxu0
        %1464 = vdwg.mxu0
        %v1465 = vmul.f32 %v1410, %v1460
        %1466 = vrot.lane.b32.xlu0 %v669, 64
        %v1467 = vpop.permute.xlu0 %1466
        %v1469 = vmul.f32 %v1465, %v1467
        %v1470 = vadd.f32 %v551, %v1469
        %v1471 = vld [vmem:[%s7] sm:$0x1]
        %v1472 = vld [vmem:[%s8] sm:$0x1]
        %v1473 = vsel %vm585, %v1470, 0.0
        %1474 = vadd.xlane.f32.xlu0 %v1473
        %v1475 = vpop.xlane.xlu0 %1474
        %v1476 = vmul.f32 %v1475, %v589
        %v1477 = vsub.f32 %v1470, %v1476
        %v1478 = vmul.f32 %v1477, %v1477
        %v1479 = vsel %vm585, %v1478, 0.0
        %1480 = vadd.xlane.f32.xlu0 %v1479
        %v1481 = vpop.xlane.xlu0 %1480
        %v1482 = vmul.f32 %v1481, %v589
        %v1483 = vadd.f32 %v1482, 1e-05
        %v1484 = vrsqrt.pop %v1483
        %v1485 = vmul.f32 %v1477, %v1484
        %v1487 = vlaneseq
        %v1488 = vshrl.u32 %v1487, 7
        %v1489 = vsub.s32 0, %v1488
        %v1490 = vrot.slane %v1471, %v1489
        %v1492 = vmul.f32 %v1485, %v1490
        %v1494 = vlaneseq
        %v1495 = vshrl.u32 %v1494, 7
        %v1496 = vsub.s32 0, %v1495
        %v1497 = vrot.slane %v1472, %v1496
        %v1499 = vadd.f32 %v1492, %v1497
        %v1500 = vpack.c.bf16 %v1499, %v1499
        %v1501 = vld [vmem:[%s9] sm:$0xf]
        %v1502 = vld [vmem:[%s9 + $0x4] sm:$0xf]
        %v1503 = vld [vmem:[%s9 + $0x8] sm:$0xf]
        %v1504 = vld [vmem:[%s9 + $0xc] sm:$0xf]
        %v1509 = vunpack.c.l.b16 %v1501
        %v1510 = vunpack.c.l.b16 %v1502
        %v1511 = vunpack.c.l.b16 %v1503
        %v1512 = vunpack.c.l.b16 %v1504
        %v1513 = vpack.c.b16 %v1510, %v1509
        %v1514 = vpack.c.b16 %v1512, %v1511
        %v1518 = vsel %vm585, %v1500, 0
        %1520 = vmatprep.subr.bf16.mxu0 0
        %1521 = vmatpush1.bf16.msra.mxu0 0
        %1522 = vmatprep.subr.bf16.mxu0 0
        %1523 = vmatpush1.bf16.msra.mxu0 0
        %1524 = vmatprep.subr.bf16.mxu0 0
        %1525 = vmatpush1.bf16.msra.mxu0 0
        %1526 = vmatprep.subr.bf16.mxu0 0
        %1527 = vmatpush1.bf16.msra.mxu0 0
        %1528 = vmatprep.subr.bf16.mxu0 0
        %1529 = vmatpush1.bf16.msra.mxu0 0
        %1530 = vmatprep.subr.bf16.mxu0 0
        %1531 = vmatpush1.bf16.msra.mxu0 0
        %1532 = vmatprep.subr.bf16.mxu0 0
        %1533 = vmatpush1.bf16.msra.mxu0 %v1514
        %1534 = vmatprep.subr.bf16.mxu0 0
        %1535 = vmatpush1.bf16.msra.mxu0 %v1513
        %1536 = vmatprep.subr.bf16.mxu0 0
        %1537 = vmatpush2.bf16.msra.mxu0 0
        %1538 = vmatprep.subr.bf16.mxu0 0
        %1539 = vmatpush2.bf16.msra.mxu0 0
        %1540 = vmatprep.subr.bf16.mxu0 0
        %1541 = vmatpush2.bf16.msra.mxu0 0
        %1542 = vmatprep.subr.bf16.mxu0 0
        %1543 = vmatpush2.bf16.msra.mxu0 0
        %1544 = vmatprep.subr.bf16.mxu0 0
        %1545 = vmatpush2.bf16.msra.mxu0 0
        %1546 = vmatprep.subr.bf16.mxu0 0
        %1547 = vmatpush2.bf16.msra.mxu0 0
        %1548 = vmatprep.subr.bf16.mxu0 0
        %1549 = vmatpush2.bf16.msra.mxu0 0
        %1550 = vmatprep.subr.bf16.mxu0 0
        %1551 = vmatpush2.bf16.msra.mxu0 0
        %1552 = vmatprep.mubr.bf16.mxu0 0
        %1553 = vmatmul.mubr.bf16.gmra.mxu0 %v1518
        %v1554 = vpop.f32.mrf.mxu0
        %v1555 = vadd.f32 0.0, %v1554
        %v1556 = vpop.f32.mrf.mxu0
        %v1557 = vpop.f32.mrf.mxu0
        %v1558 = vpop.f32.mrf.mxu0
        %1559 = vdwg.mxu0
        %v1560 = vmul.f32 %v1555, 0.5
        %v1561 = vmul.f32 %v1555, 0.044715
        %v1562 = vmul.f32 %v1561, %v1555
        %v1563 = vmul.f32 %v1562, %v1555
        %v1564 = vadd.f32 %v1555, %v1563
        %v1565 = vmul.f32 %v1564, 0.7978846
        %v1566 = vtanh.pop %v1565
        %v1567 = vadd.f32 %v1566, 1.0
        %v1568 = vmul.f32 %v1560, %v1567
        %v1569 = vpack.c.bf16 %v1568, %v1568
        %v1570 = vld [vmem:[%s10] sm:$0xf]
        %v1571 = vld [vmem:[%s10 + $0x4] sm:$0xf]
        %v1572 = vld [vmem:[%s10 + $0x8] sm:$0xf]
        %v1573 = vld [vmem:[%s10 + $0xc] sm:$0xf]
        %v1574 = vld [vmem:[%s10 + $0x10] sm:$0xf]
        %v1575 = vld [vmem:[%s10 + $0x14] sm:$0xf]
        %v1576 = vld [vmem:[%s10 + $0x18] sm:$0xf]
        %v1577 = vld [vmem:[%s10 + $0x1c] sm:$0xf]
        %v1578 = vld [vmem:[%s10 + $0x20] sm:$0xf]
        %v1579 = vld [vmem:[%s10 + $0x24] sm:$0xf]
        %v1580 = vld [vmem:[%s10 + $0x28] sm:$0xf]
        %v1581 = vld [vmem:[%s10 + $0x2c] sm:$0xf]
        %v1582 = vld [vmem:[%s10 + $0x30] sm:$0xf]
        %v1583 = vld [vmem:[%s10 + $0x34] sm:$0xf]
        %v1584 = vld [vmem:[%s10 + $0x38] sm:$0xf]
        %v1585 = vld [vmem:[%s10 + $0x3c] sm:$0xf]
        %v1602 = vunpack.c.l.b16 %v1570
        %v1603 = vunpack.c.l.b16 %v1571
        %v1604 = vunpack.c.l.b16 %v1572
        %v1605 = vunpack.c.l.b16 %v1573
        %v1606 = vunpack.c.l.b16 %v1574
        %v1607 = vunpack.c.l.b16 %v1575
        %v1608 = vunpack.c.l.b16 %v1576
        %v1609 = vunpack.c.l.b16 %v1577
        %v1610 = vunpack.c.l.b16 %v1578
        %v1611 = vunpack.c.l.b16 %v1579
        %v1612 = vunpack.c.l.b16 %v1580
        %v1613 = vunpack.c.l.b16 %v1581
        %v1614 = vunpack.c.l.b16 %v1582
        %v1615 = vunpack.c.l.b16 %v1583
        %v1616 = vunpack.c.l.b16 %v1584
        %v1617 = vunpack.c.l.b16 %v1585
        %v1618 = vpack.c.b16 %v1603, %v1602
        %v1619 = vpack.c.b16 %v1605, %v1604
        %v1620 = vpack.c.b16 %v1607, %v1606
        %v1621 = vpack.c.b16 %v1609, %v1608
        %v1622 = vpack.c.b16 %v1611, %v1610
        %v1623 = vpack.c.b16 %v1613, %v1612
        %v1624 = vpack.c.b16 %v1615, %v1614
        %v1625 = vpack.c.b16 %v1617, %v1616
        %1634 = vmatprep.subr.bf16.mxu0 0
        %1635 = vmatpush1.bf16.msra.mxu0 %v1625
        %1636 = vmatprep.subr.bf16.mxu0 0
        %1637 = vmatpush1.bf16.msra.mxu0 %v1624
        %1638 = vmatprep.subr.bf16.mxu0 0
        %1639 = vmatpush1.bf16.msra.mxu0 %v1623
        %1640 = vmatprep.subr.bf16.mxu0 0
        %1641 = vmatpush1.bf16.msra.mxu0 %v1622
        %1642 = vmatprep.subr.bf16.mxu0 0
        %1643 = vmatpush1.bf16.msra.mxu0 %v1621
        %1644 = vmatprep.subr.bf16.mxu0 0
        %1645 = vmatpush1.bf16.msra.mxu0 %v1620
        %1646 = vmatprep.subr.bf16.mxu0 0
        %1647 = vmatpush1.bf16.msra.mxu0 %v1619
        %1648 = vmatprep.subr.bf16.mxu0 0
        %1649 = vmatpush1.bf16.msra.mxu0 %v1618
        %1650 = vmatprep.subr.bf16.mxu0 0
        %1651 = vmatpush2.bf16.msra.mxu0 0
        %1652 = vmatprep.subr.bf16.mxu0 0
        %1653 = vmatpush2.bf16.msra.mxu0 0
        %1654 = vmatprep.subr.bf16.mxu0 0
        %1655 = vmatpush2.bf16.msra.mxu0 0
        %1656 = vmatprep.subr.bf16.mxu0 0
        %1657 = vmatpush2.bf16.msra.mxu0 0
        %1658 = vmatprep.subr.bf16.mxu0 0
        %1659 = vmatpush2.bf16.msra.mxu0 0
        %1660 = vmatprep.subr.bf16.mxu0 0
        %1661 = vmatpush2.bf16.msra.mxu0 0
        %1662 = vmatprep.subr.bf16.mxu0 0
        %1663 = vmatpush2.bf16.msra.mxu0 0
        %1664 = vmatprep.subr.bf16.mxu0 0
        %1665 = vmatpush2.bf16.msra.mxu0 0
        %1666 = vmatprep.mubr.bf16.mxu0 0
        %1667 = vmatmul.mubr.bf16.gmra.mxu0 %v1569
        %v1668 = vpop.f32.mrf.mxu0
        %v1669 = vadd.f32 0.0, %v1668
        %v1670 = vpop.f32.mrf.mxu0
        %v1671 = vpop.f32.mrf.mxu0
        %v1672 = vpop.f32.mrf.mxu0
        %1673 = vdwg.mxu0
        %v1674 = vadd.f32 %v1470, %v1669
        %1675 = vst.msk [vmem:[%s528] sm:$0xff] %vm585, %v1674
        %s1676 = sand.u32 %s380, 1
        %s1677 = scalar_lea.sflag [#allocation5], %s1676
        %s1678 = sand.u32 %s380, 1
        %s1679 = smul.addr %s1678, 8
        %s1680 = scalar_lea.vmem [#allocation4], %s1679
        // Predicated region
        $region85: #{tpu_custom_call.1} parent=79 // pred_check
          %p1681 = pneg %p390
        $region86: #{tpu_custom_call.1} parent=79 // pred_check_branch
          %1683 = sbr.rel (%p1681) target = $region88
        $region87: #{tpu_custom_call.1} parent=79 // pred_region
          %s1685 = ssub.s32 128, 128
          %1686 = vsyncadd %s1677, %s1685
          %s1687 = sadd.s32 %s34, %s33
          %s1688 = smul.addr %s1687, 128
          %s1689 = scalar_lea.hbm %s15, %s1688
          %s1691 = sshll.u32 %s1680, 4
          %s1692 = int_to_ptr.vmem [resolvable:$true] %s1691
          %1694 = dma.vmem_to_hbm [thread:$0]  %s1692, 128, %s1689, %s1677
        $region88: #{tpu_custom_call.1} parent=79 // pred_fallthru
          _
      $region80: #{tpu_custom_call.1} parent=5 // pred_fallthru
        _
      %p1695 = scmp.le.s32.totalorder 2, %s24
      // Predicated region
      $region89: #{tpu_custom_call.1} parent=5 // pred_check
        %p1696 = pneg %p1695
      $region90: #{tpu_custom_call.1} parent=5 // pred_check_branch
        %1698 = sbr.rel (%p1696) target = $region92
      $region91: #{tpu_custom_call.1} parent=5 // pred_region
        %s1699 = ssub.s32 %s24, 2
        // Predicated region
        $region93: #{tpu_custom_call.1} parent=91 // pred_check
          %p1700 = pneg %p396
        $region94: #{tpu_custom_call.1} parent=91 // pred_check_branch
          %1702 = sbr.rel (%p1700) target = $region96
        $region95: #{tpu_custom_call.1} parent=91 // pred_region
          %s1703 = sand.u32 %s381, 1
          %s1704 = scalar_lea.sflag [#allocation5], %s1703
          %s1705 = sand.u32 %s381, 1
          %s1706 = smul.addr %s1705, 8
          %s1707 = scalar_lea.vmem [#allocation4], %s1706
          %1708 = dma.done %s1704, 128
        $region96: #{tpu_custom_call.1} parent=91 // pred_fallthru
          _
      $region92: #{tpu_custom_call.1} parent=5 // pred_fallthru
        _
    $region6: #{tpu_custom_call.1} parent=1 // loop_footer
      %s28 = sadd.s32 1, %s24
    $region7: #{tpu_custom_call.1} parent=1 // loop_footer_branch
      %23 = sbr.rel target = $region3
    $region8: #{tpu_custom_call.1} parent=1 // loop_exit
      _
    %1709 = vsyncpa [#allocation5], 1
    %s1710 = scalar_lea.sflag [#allocation5], 1
    %1711 = vsyncpa %s1710, 1

</llo_original>
